<compile_context>
chip_gen: v5e
topology: v5e:2x2
jax: 0.10.0
libtpu: 0.0.40
codegen_flags: <defaults>
</compile_context>

<pallas_src>
import math

import jax
import jax.numpy as jnp
from jax.experimental import pallas as pl
from jax.experimental.pallas import tpu as pltpu


def _make_decoder_kernel(num_units, compute_dtype):
    """num_units = 1 + 2*num_stage  (GraphConv+BN+tanh units before the final layer)."""

    def kernel(*args):
        # args = [x_ref,
        #         (kc_ref, r_ref, scale_ref, shift_ref) * num_units,
        #         kc7_ref, r7_ref, kconv_ref, fadd_ref,
        #         out_ref]
        x_ref = args[0]
        out_ref = args[-1]
        unit_refs = args[1:1 + 4 * num_units]
        kc7_ref, r7_ref, kconv_ref, fadd_ref = args[1 + 4 * num_units:
                                                    1 + 4 * num_units + 4]

        x = x_ref[...]                                     # (bt*C, NL) f32

        def gc_bn_tanh(y, kc_ref, r_ref, sc_ref, sh_ref):
            # GraphConvolution: block-diag channel mix (one MXU pass) + fused
            # node(x)seq Kronecker matmul, both with bf16 operands / f32 acc,
            # then folded bias+BatchNorm(eval) affine and tanh in f32.
            yc = y.astype(compute_dtype)
            t = jnp.dot(kc_ref[...], yc, preferred_element_type=jnp.float32)
            t = jnp.dot(t.astype(compute_dtype), r_ref[...],
                        preferred_element_type=jnp.float32)
            return jnp.tanh(sc_ref[...] * t + sh_ref[...])

        # decoder.gc1 -> bn1 -> tanh   (dropout = identity in eval)
        y = gc_bn_tanh(x, *unit_refs[0:4])

        # GC_Block residual stages
        num_stage = (num_units - 1) // 2
        idx = 4
        for _ in range(num_stage):
            z = gc_bn_tanh(y, *unit_refs[idx:idx + 4]); idx += 4
            z = gc_bn_tanh(z, *unit_refs[idx:idx + 4]); idx += 4
            y = z + y

        # final: gc7(y) + reshape_conv(x); all remaining biases folded into fadd
        yc = y.astype(compute_dtype)
        o = jnp.dot(kc7_ref[...], yc, preferred_element_type=jnp.float32)
        o = jnp.dot(o.astype(compute_dtype), r7_ref[...],
                    preferred_element_type=jnp.float32)
        o = o + jnp.dot(kconv_ref[...], x.astype(compute_dtype),
                        preferred_element_type=jnp.float32)
        out_ref[...] = o + fadd_ref[...]

    return kernel


def _pick_bt(B, C, Co):
    """Largest divisor of B with bt*C a multiple of 8 and bt*max(C,Co) <= 128.

    128 is one MXU pass on v5e (256 on v6e/v7x); keeping the block-diagonal
    channel-mix matmul inside one pass means its K padding is free. On v7x pass
    bt=B//2 explicitly so the grid has >= 2 steps (one batch tile per TC).
    """
    best = None
    for cand in range(1, B + 1):
        if B % cand:
            continue
        if (cand * C) % 8 or (cand * Co) % 8:
            continue
        if cand * max(C, Co) > 128:
            continue
        best = cand
    return best if best is not None else B


def make_gcn_decoder(units, final, batch, *, bt=None, eps=1e-5,
                     weight_dtype=jnp.bfloat16):
    """One-time weight preparation; returns a jitted forward(x) closure.

    units: list of ((att, wc, ws, bias), (gamma, beta, running_mean, running_var))
           in forward order: [decoder.gc1/bn1] + per stage [block.gc1/bn1, block.gc2/bn2].
    final: ((att7, wc7, ws7, bias7), wconv, bconv)  -- decoder.gc7 and reshape_conv.
    batch: batch size B the returned forward() will be called with.
    bt:    batch tile per grid step (default: auto, see _pick_bt).
    weight_dtype: storage/matmul-operand dtype for the big weight matrices
           (bfloat16 recommended; accumulation is always f32, affine/tanh are f32).
    """
    (att0, wc0, ws0, _), _ = units[0]
    C = wc0.shape[0]
    N = att0.shape[0]
    L = ws0.shape[0]
    NL = N * L
    gc7, wconv, bconv = final
    att7, wc7, ws7, bias7 = gc7
    Co = wc7.shape[1]
    B = batch

    if bt is None:
        bt = _pick_bt(B, C, Co)
    assert B % bt == 0, "batch must be divisible by the batch tile"
    assert (bt * C) % 8 == 0 and (bt * Co) % 8 == 0, \
        "bt*C and bt*Co must be multiples of 8 (sublane tiling)"
    assert bt * max(C, Co) <= 128, \
        ("bt*max(C,Co) must stay within one MXU pass; for larger batch tiles "
         "replace the kron channel mix with a batched dot_general (see TODO)")
    grid = (B // bt,)

    f32 = jnp.float32
    wdt = weight_dtype
    eye_bt = jnp.eye(bt, dtype=f32)

    def prep_unit(gc, bn):
        att, wc, ws, bias = gc
        gamma, beta, mean, var = bn
        scale = (gamma.astype(f32) / jnp.sqrt(var.astype(f32) + eps))      # (C*N*L,)
        shift = beta.astype(f32) - mean.astype(f32) * scale
        scale2 = scale.reshape(C, NL)
        shift2 = shift.reshape(C, NL)
        # fold the GraphConvolution bias (per seq position l) into the BN shift
        eff_shift2 = scale2 * jnp.tile(bias.astype(f32), N)[None, :] + shift2
        kc = jnp.kron(eye_bt, wc.T.astype(f32)).astype(wdt)    # (bt*C, bt*C) block-diag
        r = jnp.kron(att.T.astype(f32), ws.astype(f32)).astype(wdt)   # (NL, NL)
        # scale/shift stay f32 (BN folding precision) and are tiled once here.
        return [kc, r, jnp.tile(scale2, (bt, 1)), jnp.tile(eff_shift2, (bt, 1))]

    weights = []
    for gc, bn in units:
        weights.extend(prep_unit(gc, bn))

    kc7 = jnp.kron(eye_bt, wc7.T.astype(f32)).astype(wdt)      # (bt*Co, bt*C)
    r7 = jnp.kron(att7.T.astype(f32), ws7.astype(f32)).astype(wdt)   # (NL, NL)
    kconv = jnp.kron(eye_bt, wconv.astype(f32)).astype(wdt)    # (bt*Co, bt*C)
    fadd = (jnp.tile(bconv.astype(f32), bt)[:, None]
            + jnp.tile(bias7.astype(f32), N)[None, :])         # (bt*Co, NL) f32
    weights.extend([kc7, r7, kconv, fadd])

    in_specs = [pl.BlockSpec((bt * C, NL), lambda i: (i, 0))]  # per-step batch tile
    for w in weights:
        # constant blocks: same index every step -> Pallas DMAs them only once
        in_specs.append(pl.BlockSpec(w.shape, lambda i: (0, 0)))
    out_specs = pl.BlockSpec((bt * Co, NL), lambda i: (i, 0))

    call = pl.pallas_call(
        _make_decoder_kernel(len(units), wdt),
        out_shape=jax.ShapeDtypeStruct((B * Co, NL), f32),
        grid_spec=pltpu.PrefetchScalarGridSpec(
            num_scalar_prefetch=0,
            grid=grid,
            in_specs=in_specs,
            out_specs=out_specs,
        ),
        compiler_params=pltpu.CompilerParams(
            dimension_semantics=("parallel",),
            vmem_limit_bytes=32 * 1024 * 1024,
        ),
    )

    @jax.jit
    def forward(x):
        x2 = x.reshape(B * C, NL).astype(f32)                  # free contiguous reshape
        out2 = call(x2, *weights)
        return out2.reshape(B, Co, N, L)

    return forward


# ----------------------------- pure-JAX reference -----------------------------

def _graph_conv_ref(x, att, wc, ws, bias):
    support = jnp.matmul(att, jnp.transpose(x, (0, 3, 2, 1)))        # (B,L,N,C)
    out_gcn = jnp.matmul(support, wc)                                 # (B,L,N,Co)
    out_fc = jnp.matmul(jnp.transpose(out_gcn, (0, 2, 3, 1)), ws)     # (B,N,Co,L)
    out_fc = jnp.transpose(out_fc, (0, 2, 1, 3))                      # (B,Co,N,L)
    return out_fc + bias


def _bn_eval_ref(y, gamma, beta, mean, var, eps):
    b = y.shape[0]
    yf = y.reshape(b, -1)
    yf = (yf - mean) * (gamma / jnp.sqrt(var + eps)) + beta
    return yf.reshape(y.shape)


def gcn_decoder_reference(x, units, final, eps=1e-5):
    gc1, bn1 = units[0]
    y = jnp.tanh(_bn_eval_ref(_graph_conv_ref(x, *gc1), *bn1, eps))
    num_stage = (len(units) - 1) // 2
    k = 1
    for _ in range(num_stage):
        gca, bna = units[k]; gcb, bnb = units[k + 1]; k += 2
        z = jnp.tanh(_bn_eval_ref(_graph_conv_ref(y, *gca), *bna, eps))
        z = jnp.tanh(_bn_eval_ref(_graph_conv_ref(z, *gcb), *bnb, eps))
        y = z + y
    gc7, wconv, bconv = final
    conv = jnp.einsum('oc,bcnl->bonl', wconv, x) + bconv[None, :, None, None]
    return _graph_conv_ref(y, *gc7) + conv


if __name__ == "__main__":
    # Small shapes: batch=8, in/out channels=4, node_n=16, seq_len=16, num_stage=1.
    # Auto bt -> bt=8 (grid=(1,), bt*C=32): no per-step overhead on single-TC chips.
    B, C, Co = 8, 4, 4
    N, L = 16, 16
    num_stage = 1

    key = jax.random.PRNGKey(0)
    stdv = 1.0 / math.sqrt(N)   # GraphConvolution.reset_parameters
    feat = C * N * L

    def make_gc(k, cin, cout):
        k1, k2, k3, k4 = jax.random.split(k, 4)
        att = jax.random.uniform(k1, (N, N), jnp.float32, -stdv, stdv)
        wc = jax.random.uniform(k2, (cin, cout), jnp.float32, -stdv, stdv)
        ws = jax.random.uniform(k3, (L, L), jnp.float32, -stdv, stdv)
        bias = jax.random.uniform(k4, (L,), jnp.float32, -stdv, stdv)
        return (att, wc, ws, bias)

    def make_bn(k):
        k1, k2, k3, k4 = jax.random.split(k, 4)
        gamma = jax.random.uniform(k1, (feat,), jnp.float32, 0.5, 1.5)
        beta = jax.random.uniform(k2, (feat,), jnp.float32, -0.1, 0.1)
        mean = jax.random.uniform(k3, (feat,), jnp.float32, -0.1, 0.1)
        var = jax.random.uniform(k4, (feat,), jnp.float32, 0.5, 1.5)
        return (gamma, beta, mean, var)

    keys = jax.random.split(key, 16)
    x = jax.random.normal(keys[0], (B, C, N, L), dtype=jnp.float32)

    units = [(make_gc(keys[1], C, C), make_bn(keys[2]))]          # decoder.gc1 + bn1
    for s in range(num_stage):                                     # GC_Block stages
        units.append((make_gc(keys[3 + 4 * s], C, C), make_bn(keys[4 + 4 * s])))
        units.append((make_gc(keys[5 + 4 * s], C, C), make_bn(keys[6 + 4 * s])))

    gc7 = make_gc(keys[10], C, Co)                                 # decoder.gc7
    bound = 1.0 / math.sqrt(C)                                     # reshape_conv (1x1)
    wconv = jax.random.uniform(keys[11], (Co, C), jnp.float32, -bound, bound)
    bconv = jax.random.uniform(keys[12], (Co,), jnp.float32, -bound, bound)
    final = (gc7, wconv, bconv)

    ref = jax.block_until_ready(gcn_decoder_reference(x, units, final))

    # f32 weights: bit-for-bit-ish check against the f32 reference.
    fwd_f32 = make_gcn_decoder(units, final, B, weight_dtype=jnp.float32)
    out_f32 = jax.block_until_ready(fwd_f32(x))
    assert out_f32.shape == (B, Co, N, L), out_f32.shape
    err_f32 = float(jnp.max(jnp.abs(out_f32 - ref)))
    assert err_f32 < 1e-4, f"f32 max abs err = {err_f32}"

    # bf16 weights / bf16 MXU operands, f32 accumulation (default, recommended).
    fwd_bf16 = make_gcn_decoder(units, final, B)                   # weight_dtype=bf16
    out_bf16 = jax.block_until_ready(fwd_bf16(x))
    assert out_bf16.shape == (B, Co, N, L), out_bf16.shape
    err_bf16 = float(jnp.max(jnp.abs(out_bf16 - ref)))
    assert err_bf16 < 5e-2, f"bf16 max abs err = {err_bf16}"

    print("KERNEL_OK")
</pallas_src>

<mosaic_0001>
module attributes {stable_mosaic.version = 11 : i64} {
  func.func @kernel(%arg0: i32, %arg1: memref<32x256xf32, #tpu.memory_space<vmem>>, %arg2: memref<32x32xf32, #tpu.memory_space<vmem>>, %arg3: memref<256x256xf32, #tpu.memory_space<vmem>>, %arg4: memref<32x256xf32, #tpu.memory_space<vmem>>, %arg5: memref<32x256xf32, #tpu.memory_space<vmem>>, %arg6: memref<32x32xf32, #tpu.memory_space<vmem>>, %arg7: memref<256x256xf32, #tpu.memory_space<vmem>>, %arg8: memref<32x256xf32, #tpu.memory_space<vmem>>, %arg9: memref<32x256xf32, #tpu.memory_space<vmem>>, %arg10: memref<32x32xf32, #tpu.memory_space<vmem>>, %arg11: memref<256x256xf32, #tpu.memory_space<vmem>>, %arg12: memref<32x256xf32, #tpu.memory_space<vmem>>, %arg13: memref<32x256xf32, #tpu.memory_space<vmem>>, %arg14: memref<32x32xf32, #tpu.memory_space<vmem>>, %arg15: memref<256x256xf32, #tpu.memory_space<vmem>>, %arg16: memref<32x32xf32, #tpu.memory_space<vmem>>, %arg17: memref<32x256xf32, #tpu.memory_space<vmem>>, %arg18: memref<32x256xf32, #tpu.memory_space<vmem>>) attributes {dimension_semantics = [#tpu.dimension_semantics<parallel>], iteration_bounds = array<i64: 1>, scalar_prefetch = 0 : i64, scratch_operands = 0 : i64, tpu.core_type = #tpu.core_type<tc>, window_params = [{transform_indices = @transform_0, window_bounds = array<i64: 32, 256>}, {pipeline_mode = #tpu.pipeline_mode<synchronous>, transform_indices = @transform_1, window_bounds = array<i64: 32, 32>}, {pipeline_mode = #tpu.pipeline_mode<synchronous>, transform_indices = @transform_2, window_bounds = array<i64: 256, 256>}, {pipeline_mode = #tpu.pipeline_mode<synchronous>, transform_indices = @transform_3, window_bounds = array<i64: 32, 256>}, {pipeline_mode = #tpu.pipeline_mode<synchronous>, transform_indices = @transform_4, window_bounds = array<i64: 32, 256>}, {pipeline_mode = #tpu.pipeline_mode<synchronous>, transform_indices = @transform_5, window_bounds = array<i64: 32, 32>}, {pipeline_mode = #tpu.pipeline_mode<synchronous>, transform_indices = @transform_6, window_bounds = array<i64: 256, 256>}, {pipeline_mode = #tpu.pipeline_mode<synchronous>, transform_indices = @transform_7, window_bounds = array<i64: 32, 256>}, {pipeline_mode = #tpu.pipeline_mode<synchronous>, transform_indices = @transform_8, window_bounds = array<i64: 32, 256>}, {pipeline_mode = #tpu.pipeline_mode<synchronous>, transform_indices = @transform_9, window_bounds = array<i64: 32, 32>}, {pipeline_mode = #tpu.pipeline_mode<synchronous>, transform_indices = @transform_10, window_bounds = array<i64: 256, 256>}, {pipeline_mode = #tpu.pipeline_mode<synchronous>, transform_indices = @transform_11, window_bounds = array<i64: 32, 256>}, {pipeline_mode = #tpu.pipeline_mode<synchronous>, transform_indices = @transform_12, window_bounds = array<i64: 32, 256>}, {pipeline_mode = #tpu.pipeline_mode<synchronous>, transform_indices = @transform_13, window_bounds = array<i64: 32, 32>}, {pipeline_mode = #tpu.pipeline_mode<synchronous>, transform_indices = @transform_14, window_bounds = array<i64: 256, 256>}, {pipeline_mode = #tpu.pipeline_mode<synchronous>, transform_indices = @transform_15, window_bounds = array<i64: 32, 32>}, {pipeline_mode = #tpu.pipeline_mode<synchronous>, transform_indices = @transform_16, window_bounds = array<i64: 32, 256>}, {transform_indices = @transform_17, window_bounds = array<i64: 32, 256>}]} {
    %c0 = arith.constant 0 : index
    %c0_0 = arith.constant 0 : index
    %0 = vector.load %arg1[%c0, %c0_0] : memref<32x256xf32, #tpu.memory_space<vmem>>, vector<32x256xf32>
    %c0_1 = arith.constant 0 : index
    %c0_2 = arith.constant 0 : index
    %1 = vector.load %arg2[%c0_1, %c0_2] : memref<32x32xf32, #tpu.memory_space<vmem>>, vector<32x32xf32>
    %cst = arith.constant dense<0.000000e+00> : vector<32x256xf32>
    %2 = tpu.matmul %1, %0, %cst {dimension_numbers = #tpu.dot_dimension_numbers<[1], [0], [0], [1], [0, 0, 1, 1], [], []>} : vector<32x32xf32>, vector<32x256xf32>, vector<32x256xf32> -> vector<32x256xf32>
    %c0_3 = arith.constant 0 : index
    %c0_4 = arith.constant 0 : index
    %3 = vector.load %arg3[%c0_3, %c0_4] : memref<256x256xf32, #tpu.memory_space<vmem>>, vector<256x256xf32>
    %cst_5 = arith.constant dense<0.000000e+00> : vector<32x256xf32>
    %4 = tpu.matmul %2, %3, %cst_5 {dimension_numbers = #tpu.dot_dimension_numbers<[1], [0], [0], [1], [0, 0, 1, 1], [], []>} : vector<32x256xf32>, vector<256x256xf32>, vector<32x256xf32> -> vector<32x256xf32>
    %c0_6 = arith.constant 0 : index
    %c0_7 = arith.constant 0 : index
    %5 = vector.load %arg4[%c0_6, %c0_7] : memref<32x256xf32, #tpu.memory_space<vmem>>, vector<32x256xf32>
    %6 = arith.mulf %5, %4 : vector<32x256xf32>
    %c0_8 = arith.constant 0 : index
    %c0_9 = arith.constant 0 : index
    %7 = vector.load %arg5[%c0_8, %c0_9] : memref<32x256xf32, #tpu.memory_space<vmem>>, vector<32x256xf32>
    %8 = arith.addf %6, %7 : vector<32x256xf32>
    %9 = math.tanh %8 : vector<32x256xf32>
    %c0_10 = arith.constant 0 : index
    %c0_11 = arith.constant 0 : index
    %10 = vector.load %arg6[%c0_10, %c0_11] : memref<32x32xf32, #tpu.memory_space<vmem>>, vector<32x32xf32>
    %cst_12 = arith.constant dense<0.000000e+00> : vector<32x256xf32>
    %11 = tpu.matmul %10, %9, %cst_12 {dimension_numbers = #tpu.dot_dimension_numbers<[1], [0], [0], [1], [0, 0, 1, 1], [], []>} : vector<32x32xf32>, vector<32x256xf32>, vector<32x256xf32> -> vector<32x256xf32>
    %c0_13 = arith.constant 0 : index
    %c0_14 = arith.constant 0 : index
    %12 = vector.load %arg7[%c0_13, %c0_14] : memref<256x256xf32, #tpu.memory_space<vmem>>, vector<256x256xf32>
    %cst_15 = arith.constant dense<0.000000e+00> : vector<32x256xf32>
    %13 = tpu.matmul %11, %12, %cst_15 {dimension_numbers = #tpu.dot_dimension_numbers<[1], [0], [0], [1], [0, 0, 1, 1], [], []>} : vector<32x256xf32>, vector<256x256xf32>, vector<32x256xf32> -> vector<32x256xf32>
    %c0_16 = arith.constant 0 : index
    %c0_17 = arith.constant 0 : index
    %14 = vector.load %arg8[%c0_16, %c0_17] : memref<32x256xf32, #tpu.memory_space<vmem>>, vector<32x256xf32>
    %15 = arith.mulf %14, %13 : vector<32x256xf32>
    %c0_18 = arith.constant 0 : index
    %c0_19 = arith.constant 0 : index
    %16 = vector.load %arg9[%c0_18, %c0_19] : memref<32x256xf32, #tpu.memory_space<vmem>>, vector<32x256xf32>
    %17 = arith.addf %15, %16 : vector<32x256xf32>
    %18 = math.tanh %17 : vector<32x256xf32>
    %c0_20 = arith.constant 0 : index
    %c0_21 = arith.constant 0 : index
    %19 = vector.load %arg10[%c0_20, %c0_21] : memref<32x32xf32, #tpu.memory_space<vmem>>, vector<32x32xf32>
    %cst_22 = arith.constant dense<0.000000e+00> : vector<32x256xf32>
    %20 = tpu.matmul %19, %18, %cst_22 {dimension_numbers = #tpu.dot_dimension_numbers<[1], [0], [0], [1], [0, 0, 1, 1], [], []>} : vector<32x32xf32>, vector<32x256xf32>, vector<32x256xf32> -> vector<32x256xf32>
    %c0_23 = arith.constant 0 : index
    %c0_24 = arith.constant 0 : index
    %21 = vector.load %arg11[%c0_23, %c0_24] : memref<256x256xf32, #tpu.memory_space<vmem>>, vector<256x256xf32>
    %cst_25 = arith.constant dense<0.000000e+00> : vector<32x256xf32>
    %22 = tpu.matmul %20, %21, %cst_25 {dimension_numbers = #tpu.dot_dimension_numbers<[1], [0], [0], [1], [0, 0, 1, 1], [], []>} : vector<32x256xf32>, vector<256x256xf32>, vector<32x256xf32> -> vector<32x256xf32>
    %c0_26 = arith.constant 0 : index
    %c0_27 = arith.constant 0 : index
    %23 = vector.load %arg12[%c0_26, %c0_27] : memref<32x256xf32, #tpu.memory_space<vmem>>, vector<32x256xf32>
    %24 = arith.mulf %23, %22 : vector<32x256xf32>
    %c0_28 = arith.constant 0 : index
    %c0_29 = arith.constant 0 : index
    %25 = vector.load %arg13[%c0_28, %c0_29] : memref<32x256xf32, #tpu.memory_space<vmem>>, vector<32x256xf32>
    %26 = arith.addf %24, %25 : vector<32x256xf32>
    %27 = math.tanh %26 : vector<32x256xf32>
    %28 = arith.addf %27, %9 : vector<32x256xf32>
    %c0_30 = arith.constant 0 : index
    %c0_31 = arith.constant 0 : index
    %29 = vector.load %arg14[%c0_30, %c0_31] : memref<32x32xf32, #tpu.memory_space<vmem>>, vector<32x32xf32>
    %cst_32 = arith.constant dense<0.000000e+00> : vector<32x256xf32>
    %30 = tpu.matmul %29, %28, %cst_32 {dimension_numbers = #tpu.dot_dimension_numbers<[1], [0], [0], [1], [0, 0, 1, 1], [], []>} : vector<32x32xf32>, vector<32x256xf32>, vector<32x256xf32> -> vector<32x256xf32>
    %c0_33 = arith.constant 0 : index
    %c0_34 = arith.constant 0 : index
    %31 = vector.load %arg15[%c0_33, %c0_34] : memref<256x256xf32, #tpu.memory_space<vmem>>, vector<256x256xf32>
    %cst_35 = arith.constant dense<0.000000e+00> : vector<32x256xf32>
    %32 = tpu.matmul %30, %31, %cst_35 {dimension_numbers = #tpu.dot_dimension_numbers<[1], [0], [0], [1], [0, 0, 1, 1], [], []>} : vector<32x256xf32>, vector<256x256xf32>, vector<32x256xf32> -> vector<32x256xf32>
    %c0_36 = arith.constant 0 : index
    %c0_37 = arith.constant 0 : index
    %33 = vector.load %arg16[%c0_36, %c0_37] : memref<32x32xf32, #tpu.memory_space<vmem>>, vector<32x32xf32>
    %cst_38 = arith.constant dense<0.000000e+00> : vector<32x256xf32>
    %34 = tpu.matmul %33, %0, %cst_38 {dimension_numbers = #tpu.dot_dimension_numbers<[1], [0], [0], [1], [0, 0, 1, 1], [], []>} : vector<32x32xf32>, vector<32x256xf32>, vector<32x256xf32> -> vector<32x256xf32>
    %35 = arith.addf %32, %34 : vector<32x256xf32>
    %c0_39 = arith.constant 0 : index
    %c0_40 = arith.constant 0 : index
    %36 = vector.load %arg17[%c0_39, %c0_40] : memref<32x256xf32, #tpu.memory_space<vmem>>, vector<32x256xf32>
    %37 = arith.addf %35, %36 : vector<32x256xf32>
    %c0_41 = arith.constant 0 : index
    %c0_42 = arith.constant 0 : index
    %38 = vector.load %arg18[%c0_41, %c0_42] : memref<32x256xf32, #tpu.memory_space<vmem>>, vector<32x256xf32>
    tpu.vector_store %arg18[%c0_41, %c0_42], %37 {strides = array<i32>} : memref<32x256xf32, #tpu.memory_space<vmem>>, vector<32x256xf32>,
    return
  }
  func.func @transform_0(%arg0: i32) -> (i32, i32) {
    %c0_i32 = arith.constant 0 : i32
    %c0_i32_0 = arith.constant 0 : i32
    return %arg0, %c0_i32 : i32, i32
  }
  func.func @transform_1(%arg0: i32) -> (i32, i32) {
    %c0_i32 = arith.constant 0 : i32
    %c0_i32_0 = arith.constant 0 : i32
    %c0_i32_1 = arith.constant 0 : i32
    return %c0_i32, %c0_i32_0 : i32, i32
  }
  func.func @transform_2(%arg0: i32) -> (i32, i32) {
    %c0_i32 = arith.constant 0 : i32
    %c0_i32_0 = arith.constant 0 : i32
    %c0_i32_1 = arith.constant 0 : i32
    return %c0_i32, %c0_i32_0 : i32, i32
  }
  func.func @transform_3(%arg0: i32) -> (i32, i32) {
    %c0_i32 = arith.constant 0 : i32
    %c0_i32_0 = arith.constant 0 : i32
    %c0_i32_1 = arith.constant 0 : i32
    return %c0_i32, %c0_i32_0 : i32, i32
  }
  func.func @transform_4(%arg0: i32) -> (i32, i32) {
    %c0_i32 = arith.constant 0 : i32
    %c0_i32_0 = arith.constant 0 : i32
    %c0_i32_1 = arith.constant 0 : i32
    return %c0_i32, %c0_i32_0 : i32, i32
  }
  func.func @transform_5(%arg0: i32) -> (i32, i32) {
    %c0_i32 = arith.constant 0 : i32
    %c0_i32_0 = arith.constant 0 : i32
    %c0_i32_1 = arith.constant 0 : i32
    return %c0_i32, %c0_i32_0 : i32, i32
  }
  func.func @transform_6(%arg0: i32) -> (i32, i32) {
    %c0_i32 = arith.constant 0 : i32
    %c0_i32_0 = arith.constant 0 : i32
    %c0_i32_1 = arith.constant 0 : i32
    return %c0_i32, %c0_i32_0 : i32, i32
  }
  func.func @transform_7(%arg0: i32) -> (i32, i32) {
    %c0_i32 = arith.constant 0 : i32
    %c0_i32_0 = arith.constant 0 : i32
    %c0_i32_1 = arith.constant 0 : i32
    return %c0_i32, %c0_i32_0 : i32, i32
  }
  func.func @transform_8(%arg0: i32) -> (i32, i32) {
    %c0_i32 = arith.constant 0 : i32
    %c0_i32_0 = arith.constant 0 : i32
    %c0_i32_1 = arith.constant 0 : i32
    return %c0_i32, %c0_i32_0 : i32, i32
  }
  func.func @transform_9(%arg0: i32) -> (i32, i32) {
    %c0_i32 = arith.constant 0 : i32
    %c0_i32_0 = arith.constant 0 : i32
    %c0_i32_1 = arith.constant 0 : i32
    return %c0_i32, %c0_i32_0 : i32, i32
  }
  func.func @transform_10(%arg0: i32) -> (i32, i32) {
    %c0_i32 = arith.constant 0 : i32
    %c0_i32_0 = arith.constant 0 : i32
    %c0_i32_1 = arith.constant 0 : i32
    return %c0_i32, %c0_i32_0 : i32, i32
  }
  func.func @transform_11(%arg0: i32) -> (i32, i32) {
    %c0_i32 = arith.constant 0 : i32
    %c0_i32_0 = arith.constant 0 : i32
    %c0_i32_1 = arith.constant 0 : i32
    return %c0_i32, %c0_i32_0 : i32, i32
  }
  func.func @transform_12(%arg0: i32) -> (i32, i32) {
    %c0_i32 = arith.constant 0 : i32
    %c0_i32_0 = arith.constant 0 : i32
    %c0_i32_1 = arith.constant 0 : i32
    return %c0_i32, %c0_i32_0 : i32, i32
  }
  func.func @transform_13(%arg0: i32) -> (i32, i32) {
    %c0_i32 = arith.constant 0 : i32
    %c0_i32_0 = arith.constant 0 : i32
    %c0_i32_1 = arith.constant 0 : i32
    return %c0_i32, %c0_i32_0 : i32, i32
  }
  func.func @transform_14(%arg0: i32) -> (i32, i32) {
    %c0_i32 = arith.constant 0 : i32
    %c0_i32_0 = arith.constant 0 : i32
    %c0_i32_1 = arith.constant 0 : i32
    return %c0_i32, %c0_i32_0 : i32, i32
  }
  func.func @transform_15(%arg0: i32) -> (i32, i32) {
    %c0_i32 = arith.constant 0 : i32
    %c0_i32_0 = arith.constant 0 : i32
    %c0_i32_1 = arith.constant 0 : i32
    return %c0_i32, %c0_i32_0 : i32, i32
  }
  func.func @transform_16(%arg0: i32) -> (i32, i32) {
    %c0_i32 = arith.constant 0 : i32
    %c0_i32_0 = arith.constant 0 : i32
    %c0_i32_1 = arith.constant 0 : i32
    return %c0_i32, %c0_i32_0 : i32, i32
  }
  func.func @transform_17(%arg0: i32) -> (i32, i32) {
    %c0_i32 = arith.constant 0 : i32
    %c0_i32_0 = arith.constant 0 : i32
    return %arg0, %c0_i32 : i32, i32
  }
}

</mosaic_0001>

<llo_original>
// kernel: forward.1
$region0: #{forward.1}
  #allocation0 [shape = 'u32[]', space=smem, size = 0x4, offset = 0x4, fixed_abs, tag = 'smem constant byte address 0x4 - core index']
  #allocation1 [shape = 'u32[72,128]{1,0:T(1,128)}', space=vmem, size = 0x9000, scoped, tag = 'internal scratch']
  %s0 = inlined_call_operand.vmem [shape: f32[32,256], index: 0, kind: input, shape index: {}]
  %s1 = inlined_call_operand.hbm [shape: f32[32,32], index: 1, kind: input, shape index: {}]
  %s2 = inlined_call_operand.hbm [shape: f32[256,256], index: 2, kind: input, shape index: {}]
  %s3 = inlined_call_operand.hbm [shape: f32[32,256], index: 3, kind: input, shape index: {}]
  %s4 = inlined_call_operand.hbm [shape: f32[32,256], index: 4, kind: input, shape index: {}]
  %s5 = inlined_call_operand.hbm [shape: f32[32,32], index: 5, kind: input, shape index: {}]
  %s6 = inlined_call_operand.hbm [shape: f32[256,256], index: 6, kind: input, shape index: {}]
  %s7 = inlined_call_operand.hbm [shape: f32[32,256], index: 7, kind: input, shape index: {}]
  %s8 = inlined_call_operand.hbm [shape: f32[32,256], index: 8, kind: input, shape index: {}]
  %s9 = inlined_call_operand.hbm [shape: f32[32,32], index: 9, kind: input, shape index: {}]
  %s10 = inlined_call_operand.hbm [shape: f32[256,256], index: 10, kind: input, shape index: {}]
  %s11 = inlined_call_operand.hbm [shape: f32[32,256], index: 11, kind: input, shape index: {}]
  %s12 = inlined_call_operand.hbm [shape: f32[32,256], index: 12, kind: input, shape index: {}]
  %s13 = inlined_call_operand.hbm [shape: f32[32,32], index: 13, kind: input, shape index: {}]
  %s14 = inlined_call_operand.vmem [shape: f32[256,256], index: 14, kind: input, shape index: {}]
  %s15 = inlined_call_operand.hbm [shape: f32[32,32], index: 15, kind: input, shape index: {}]
  %s16 = inlined_call_operand.vmem [shape: f32[32,256], index: 16, kind: input, shape index: {}]
  %s17 = inlined_call_operand.vmem [shape: f32[32,256], index: 17, kind: output, shape index: {}]
  %s18 = sld [smem:[#allocation0]]
  $region134: #{forward.1} parent=0
    _
  %s20 = ssub.s32 1, %s18
  %s21 = scalar_select 0, %s20, %s18
  $region1: #{forward.1} parent=0
    #allocation2 [shape = 'u8[16384]{0}', space=vmem, size = 0x4000, scoped, tag = 'input window, operand 1, single buffered']
    #allocation3 [shape = 's32[1]{0}', space=sflag, size = 0x4, scoped, tag = 'scoped memory for forward.1']
    #allocation4 [shape = 'u8[262144]{0}', space=vmem, size = 0x40000, scoped, tag = 'input window, operand 2, single buffered']
    #allocation5 [shape = 's32[1]{0}', space=sflag, size = 0x4, scoped, tag = 'scoped memory for forward.1']
    #allocation6 [shape = 'u8[32768]{0}', space=vmem, size = 0x8000, scoped, tag = 'input window, operand 3, single buffered']
    #allocation7 [shape = 'u8[32768]{0}', space=vmem, size = 0x8000, scoped, tag = 'input window, operand 4, single buffered']
    #allocation8 [shape = 's32[1]{0}', space=sflag, size = 0x4, scoped, tag = 'scoped memory for forward.1']
    #allocation9 [shape = 'u8[16384]{0}', space=vmem, size = 0x4000, scoped, tag = 'input window, operand 5, single buffered']
    #allocation10 [shape = 'u8[262144]{0}', space=vmem, size = 0x40000, scoped, tag = 'input window, operand 6, single buffered']
    #allocation11 [shape = 's32[1]{0}', space=sflag, size = 0x4, scoped, tag = 'scoped memory for forward.1']
    #allocation12 [shape = 'u8[32768]{0}', space=vmem, size = 0x8000, scoped, tag = 'input window, operand 7, single buffered']
    #allocation13 [shape = 'u8[32768]{0}', space=vmem, size = 0x8000, scoped, tag = 'input window, operand 8, single buffered']
    #allocation14 [shape = 's32[1]{0}', space=sflag, size = 0x4, scoped, tag = 'scoped memory for forward.1']
    #allocation15 [shape = 'u8[16384]{0}', space=vmem, size = 0x4000, scoped, tag = 'input window, operand 9, single buffered']
    #allocation16 [shape = 'u8[262144]{0}', space=vmem, size = 0x40000, scoped, tag = 'input window, operand 10, single buffered']
    #allocation17 [shape = 's32[1]{0}', space=sflag, size = 0x4, scoped, tag = 'scoped memory for forward.1']
    #allocation18 [shape = 'u8[32768]{0}', space=vmem, size = 0x8000, scoped, tag = 'input window, operand 11, single buffered']
    #allocation19 [shape = 'u8[32768]{0}', space=vmem, size = 0x8000, scoped, tag = 'input window, operand 12, single buffered']
    #allocation20 [shape = 's32[1]{0}', space=sflag, size = 0x4, scoped, tag = 'scoped memory for forward.1']
    #allocation21 [shape = 'u8[16384]{0}', space=vmem, size = 0x4000, scoped, tag = 'input window, operand 13, single buffered']
    #allocation22 [shape = 'u8[16384]{0}', space=vmem, size = 0x4000, scoped, tag = 'input window, operand 15, single buffered']
    #allocation23 [shape = 's32[1]{0}', space=sflag, size = 0x4, scoped, tag = 'scoped memory for forward.1']
    %22 = vsyncpa [#allocation3], 0
    %23 = vsyncpa [#allocation5], 0
    %24 = vsyncpa [#allocation8], 0
    %25 = vsyncpa [#allocation11], 0
    %26 = vsyncpa [#allocation14], 0
    %27 = vsyncpa [#allocation17], 0
    %28 = vsyncpa [#allocation20], 0
    %29 = vsyncpa [#allocation23], 0
    // Predicated region
    $region2: #{forward.1} parent=1 // pred_check
      _
    $region3: #{forward.1} parent=1 // pred_check_branch
      %31 = sbr.rel (0) target = $region5
    $region4: #{forward.1} parent=1 // pred_region
      _
    $region5: #{forward.1} parent=1 // pred_fallthru
      _
    // Predicated region
    $region6: #{forward.1} parent=1 // pred_check
      _
    $region7: #{forward.1} parent=1 // pred_check_branch
      %33 = sbr.rel (0) target = $region9
    $region8: #{forward.1} parent=1 // pred_region
      %35 = vsyncadd [#allocation3], 0
      %s36 = sshll.u32 %s1, 4
      %s37 = int_to_ptr.hbm [resolvable:$true] %s36
      %s38 = sshll.u32 [#allocation2], 4
      %s39 = int_to_ptr.vmem [resolvable:$true] %s38
      %44 = dma.hbm_to_vmem [thread:$0]  %s37, 512, %s39, [#allocation3], 128, 128, 8
    $region9: #{forward.1} parent=1 // pred_fallthru
      _
    // Predicated region
    $region10: #{forward.1} parent=1 // pred_check
      _
    $region11: #{forward.1} parent=1 // pred_check_branch
      %46 = sbr.rel (0) target = $region13
    $region12: #{forward.1} parent=1 // pred_region
      %48 = vsyncadd [#allocation5], 0
      %s49 = sshll.u32 %s2, 4
      %s50 = int_to_ptr.hbm [resolvable:$true] %s49
      %s51 = sshll.u32 [#allocation4], 4
      %s52 = int_to_ptr.vmem [resolvable:$true] %s51
      %57 = dma.hbm_to_vmem [thread:$0]  %s50, 8192, %s52, [#allocation5], 256, 256, 16
    $region13: #{forward.1} parent=1 // pred_fallthru
      _
    // Predicated region
    $region14: #{forward.1} parent=1 // pred_check
      _
    $region15: #{forward.1} parent=1 // pred_check_branch
      %59 = sbr.rel (0) target = $region17
    $region16: #{forward.1} parent=1 // pred_region
      %61 = vsyncadd [#allocation5], 0
      %s62 = sshll.u32 %s3, 4
      %s63 = int_to_ptr.hbm [resolvable:$true] %s62
      %s64 = sshll.u32 [#allocation6], 4
      %s65 = int_to_ptr.vmem [resolvable:$true] %s64
      %70 = dma.hbm_to_vmem [thread:$0]  %s63, 1024, %s65, [#allocation5], 256, 256, 16
    $region17: #{forward.1} parent=1 // pred_fallthru
      _
    // Predicated region
    $region18: #{forward.1} parent=1 // pred_check
      _
    $region19: #{forward.1} parent=1 // pred_check_branch
      %72 = sbr.rel (0) target = $region21
    $region20: #{forward.1} parent=1 // pred_region
      %74 = vsyncadd [#allocation8], 0
      %s75 = sshll.u32 %s4, 4
      %s76 = int_to_ptr.hbm [resolvable:$true] %s75
      %s77 = sshll.u32 [#allocation7], 4
      %s78 = int_to_ptr.vmem [resolvable:$true] %s77
      %83 = dma.hbm_to_vmem [thread:$0]  %s76, 1024, %s78, [#allocation8], 256, 256, 16
    $region21: #{forward.1} parent=1 // pred_fallthru
      _
    // Predicated region
    $region22: #{forward.1} parent=1 // pred_check
      _
    $region23: #{forward.1} parent=1 // pred_check_branch
      %85 = sbr.rel (0) target = $region25
    $region24: #{forward.1} parent=1 // pred_region
      %87 = vsyncadd [#allocation8], 0
      %s88 = sshll.u32 %s5, 4
      %s89 = int_to_ptr.hbm [resolvable:$true] %s88
      %s90 = sshll.u32 [#allocation9], 4
      %s91 = int_to_ptr.vmem [resolvable:$true] %s90
      %96 = dma.hbm_to_vmem [thread:$0]  %s89, 512, %s91, [#allocation8], 128, 128, 8
    $region25: #{forward.1} parent=1 // pred_fallthru
      _
    // Predicated region
    $region26: #{forward.1} parent=1 // pred_check
      _
    $region27: #{forward.1} parent=1 // pred_check_branch
      %98 = sbr.rel (0) target = $region29
    $region28: #{forward.1} parent=1 // pred_region
      %100 = vsyncadd [#allocation11], 0
      %s101 = sshll.u32 %s6, 4
      %s102 = int_to_ptr.hbm [resolvable:$true] %s101
      %s103 = sshll.u32 [#allocation10], 4
      %s104 = int_to_ptr.vmem [resolvable:$true] %s103
      %109 = dma.hbm_to_vmem [thread:$0]  %s102, 8192, %s104, [#allocation11], 256, 256, 16
    $region29: #{forward.1} parent=1 // pred_fallthru
      _
    // Predicated region
    $region30: #{forward.1} parent=1 // pred_check
      _
    $region31: #{forward.1} parent=1 // pred_check_branch
      %111 = sbr.rel (0) target = $region33
    $region32: #{forward.1} parent=1 // pred_region
      %113 = vsyncadd [#allocation11], 0
      %s114 = sshll.u32 %s7, 4
      %s115 = int_to_ptr.hbm [resolvable:$true] %s114
      %s116 = sshll.u32 [#allocation12], 4
      %s117 = int_to_ptr.vmem [resolvable:$true] %s116
      %122 = dma.hbm_to_vmem [thread:$0]  %s115, 1024, %s117, [#allocation11], 256, 256, 16
    $region33: #{forward.1} parent=1 // pred_fallthru
      _
    // Predicated region
    $region34: #{forward.1} parent=1 // pred_check
      _
    $region35: #{forward.1} parent=1 // pred_check_branch
      %124 = sbr.rel (0) target = $region37
    $region36: #{forward.1} parent=1 // pred_region
      %126 = vsyncadd [#allocation14], 0
      %s127 = sshll.u32 %s8, 4
      %s128 = int_to_ptr.hbm [resolvable:$true] %s127
      %s129 = sshll.u32 [#allocation13], 4
      %s130 = int_to_ptr.vmem [resolvable:$true] %s129
      %135 = dma.hbm_to_vmem [thread:$0]  %s128, 1024, %s130, [#allocation14], 256, 256, 16
    $region37: #{forward.1} parent=1 // pred_fallthru
      _
    // Predicated region
    $region38: #{forward.1} parent=1 // pred_check
      _
    $region39: #{forward.1} parent=1 // pred_check_branch
      %137 = sbr.rel (0) target = $region41
    $region40: #{forward.1} parent=1 // pred_region
      %139 = vsyncadd [#allocation14], 0
      %s140 = sshll.u32 %s9, 4
      %s141 = int_to_ptr.hbm [resolvable:$true] %s140
      %s142 = sshll.u32 [#allocation15], 4
      %s143 = int_to_ptr.vmem [resolvable:$true] %s142
      %148 = dma.hbm_to_vmem [thread:$0]  %s141, 512, %s143, [#allocation14], 128, 128, 8
    $region41: #{forward.1} parent=1 // pred_fallthru
      _
    // Predicated region
    $region42: #{forward.1} parent=1 // pred_check
      _
    $region43: #{forward.1} parent=1 // pred_check_branch
      %150 = sbr.rel (0) target = $region45
    $region44: #{forward.1} parent=1 // pred_region
      %152 = vsyncadd [#allocation17], 0
      %s153 = sshll.u32 %s10, 4
      %s154 = int_to_ptr.hbm [resolvable:$true] %s153
      %s155 = sshll.u32 [#allocation16], 4
      %s156 = int_to_ptr.vmem [resolvable:$true] %s155
      %161 = dma.hbm_to_vmem [thread:$0]  %s154, 8192, %s156, [#allocation17], 256, 256, 16
    $region45: #{forward.1} parent=1 // pred_fallthru
      _
    // Predicated region
    $region46: #{forward.1} parent=1 // pred_check
      _
    $region47: #{forward.1} parent=1 // pred_check_branch
      %163 = sbr.rel (0) target = $region49
    $region48: #{forward.1} parent=1 // pred_region
      %165 = vsyncadd [#allocation17], 0
      %s166 = sshll.u32 %s11, 4
      %s167 = int_to_ptr.hbm [resolvable:$true] %s166
      %s168 = sshll.u32 [#allocation18], 4
      %s169 = int_to_ptr.vmem [resolvable:$true] %s168
      %174 = dma.hbm_to_vmem [thread:$0]  %s167, 1024, %s169, [#allocation17], 256, 256, 16
    $region49: #{forward.1} parent=1 // pred_fallthru
      _
    // Predicated region
    $region50: #{forward.1} parent=1 // pred_check
      _
    $region51: #{forward.1} parent=1 // pred_check_branch
      %176 = sbr.rel (0) target = $region53
    $region52: #{forward.1} parent=1 // pred_region
      %178 = vsyncadd [#allocation20], 0
      %s179 = sshll.u32 %s12, 4
      %s180 = int_to_ptr.hbm [resolvable:$true] %s179
      %s181 = sshll.u32 [#allocation19], 4
      %s182 = int_to_ptr.vmem [resolvable:$true] %s181
      %187 = dma.hbm_to_vmem [thread:$0]  %s180, 1024, %s182, [#allocation20], 256, 256, 16
    $region53: #{forward.1} parent=1 // pred_fallthru
      _
    // Predicated region
    $region54: #{forward.1} parent=1 // pred_check
      _
    $region55: #{forward.1} parent=1 // pred_check_branch
      %189 = sbr.rel (0) target = $region57
    $region56: #{forward.1} parent=1 // pred_region
      %191 = vsyncadd [#allocation20], 0
      %s192 = sshll.u32 %s13, 4
      %s193 = int_to_ptr.hbm [resolvable:$true] %s192
      %s194 = sshll.u32 [#allocation21], 4
      %s195 = int_to_ptr.vmem [resolvable:$true] %s194
      %200 = dma.hbm_to_vmem [thread:$0]  %s193, 512, %s195, [#allocation20], 128, 128, 8
    $region57: #{forward.1} parent=1 // pred_fallthru
      _
    // Predicated region
    $region58: #{forward.1} parent=1 // pred_check
      _
    $region59: #{forward.1} parent=1 // pred_check_branch
      %202 = sbr.rel (0) target = $region61
    $region60: #{forward.1} parent=1 // pred_region
      _
    $region61: #{forward.1} parent=1 // pred_fallthru
      _
    // Predicated region
    $region62: #{forward.1} parent=1 // pred_check
      _
    $region63: #{forward.1} parent=1 // pred_check_branch
      %204 = sbr.rel (0) target = $region65
    $region64: #{forward.1} parent=1 // pred_region
      %206 = vsyncadd [#allocation23], 0
      %s207 = sshll.u32 %s15, 4
      %s208 = int_to_ptr.hbm [resolvable:$true] %s207
      %s209 = sshll.u32 [#allocation22], 4
      %s210 = int_to_ptr.vmem [resolvable:$true] %s209
      %215 = dma.hbm_to_vmem [thread:$0]  %s208, 512, %s210, [#allocation23], 128, 128, 8
    $region65: #{forward.1} parent=1 // pred_fallthru
      _
    // Predicated region
    $region66: #{forward.1} parent=1 // pred_check
      _
    $region67: #{forward.1} parent=1 // pred_check_branch
      %217 = sbr.rel (0) target = $region69
    $region68: #{forward.1} parent=1 // pred_region
      _
    $region69: #{forward.1} parent=1 // pred_fallthru
      _
    // Predicated region
    $region70: #{forward.1} parent=1 // pred_check
      _
    $region71: #{forward.1} parent=1 // pred_check_branch
      %219 = sbr.rel (0) target = $region73
    $region72: #{forward.1} parent=1 // pred_region
      %221 = dma.done [#allocation3], 512
    $region73: #{forward.1} parent=1 // pred_fallthru
      _
    // Predicated region
    $region74: #{forward.1} parent=1 // pred_check
      _
    $region75: #{forward.1} parent=1 // pred_check_branch
      %223 = sbr.rel (0) target = $region77
    $region76: #{forward.1} parent=1 // pred_region
      %225 = dma.done [#allocation5], 8192
    $region77: #{forward.1} parent=1 // pred_fallthru
      _
    // Predicated region
    $region78: #{forward.1} parent=1 // pred_check
      _
    $region79: #{forward.1} parent=1 // pred_check_branch
      %227 = sbr.rel (0) target = $region81
    $region80: #{forward.1} parent=1 // pred_region
      %229 = dma.done [#allocation5], 1024
    $region81: #{forward.1} parent=1 // pred_fallthru
      _
    // Predicated region
    $region82: #{forward.1} parent=1 // pred_check
      _
    $region83: #{forward.1} parent=1 // pred_check_branch
      %231 = sbr.rel (0) target = $region85
    $region84: #{forward.1} parent=1 // pred_region
      %233 = dma.done [#allocation8], 1024
    $region85: #{forward.1} parent=1 // pred_fallthru
      _
    // Predicated region
    $region86: #{forward.1} parent=1 // pred_check
      _
    $region87: #{forward.1} parent=1 // pred_check_branch
      %235 = sbr.rel (0) target = $region89
    $region88: #{forward.1} parent=1 // pred_region
      %237 = dma.done [#allocation8], 512
    $region89: #{forward.1} parent=1 // pred_fallthru
      _
    // Predicated region
    $region90: #{forward.1} parent=1 // pred_check
      _
    $region91: #{forward.1} parent=1 // pred_check_branch
      %239 = sbr.rel (0) target = $region93
    $region92: #{forward.1} parent=1 // pred_region
      %241 = dma.done [#allocation11], 8192
    $region93: #{forward.1} parent=1 // pred_fallthru
      _
    // Predicated region
    $region94: #{forward.1} parent=1 // pred_check
      _
    $region95: #{forward.1} parent=1 // pred_check_branch
      %243 = sbr.rel (0) target = $region97
    $region96: #{forward.1} parent=1 // pred_region
      %245 = dma.done [#allocation11], 1024
    $region97: #{forward.1} parent=1 // pred_fallthru
      _
    // Predicated region
    $region98: #{forward.1} parent=1 // pred_check
      _
    $region99: #{forward.1} parent=1 // pred_check_branch
      %247 = sbr.rel (0) target = $region101
    $region100: #{forward.1} parent=1 // pred_region
      %249 = dma.done [#allocation14], 1024
    $region101: #{forward.1} parent=1 // pred_fallthru
      _
    // Predicated region
    $region102: #{forward.1} parent=1 // pred_check
      _
    $region103: #{forward.1} parent=1 // pred_check_branch
      %251 = sbr.rel (0) target = $region105
    $region104: #{forward.1} parent=1 // pred_region
      %253 = dma.done [#allocation14], 512
    $region105: #{forward.1} parent=1 // pred_fallthru
      _
    // Predicated region
    $region106: #{forward.1} parent=1 // pred_check
      _
    $region107: #{forward.1} parent=1 // pred_check_branch
      %255 = sbr.rel (0) target = $region109
    $region108: #{forward.1} parent=1 // pred_region
      %257 = dma.done [#allocation17], 8192
    $region109: #{forward.1} parent=1 // pred_fallthru
      _
    // Predicated region
    $region110: #{forward.1} parent=1 // pred_check
      _
    $region111: #{forward.1} parent=1 // pred_check_branch
      %259 = sbr.rel (0) target = $region113
    $region112: #{forward.1} parent=1 // pred_region
      %261 = dma.done [#allocation17], 1024
    $region113: #{forward.1} parent=1 // pred_fallthru
      _
    // Predicated region
    $region114: #{forward.1} parent=1 // pred_check
      _
    $region115: #{forward.1} parent=1 // pred_check_branch
      %263 = sbr.rel (0) target = $region117
    $region116: #{forward.1} parent=1 // pred_region
      %265 = dma.done [#allocation20], 1024
    $region117: #{forward.1} parent=1 // pred_fallthru
      _
    // Predicated region
    $region118: #{forward.1} parent=1 // pred_check
      _
    $region119: #{forward.1} parent=1 // pred_check_branch
      %267 = sbr.rel (0) target = $region121
    $region120: #{forward.1} parent=1 // pred_region
      %269 = dma.done [#allocation20], 512
    $region121: #{forward.1} parent=1 // pred_fallthru
      _
    // Predicated region
    $region122: #{forward.1} parent=1 // pred_check
      _
    $region123: #{forward.1} parent=1 // pred_check_branch
      %271 = sbr.rel (0) target = $region125
    $region124: #{forward.1} parent=1 // pred_region
      %273 = dma.done [#allocation23], 512
    $region125: #{forward.1} parent=1 // pred_fallthru
      _
    %v274 = vld [vmem:[%s0] sm:$0xff]
    %v275 = vld [vmem:[%s0 + $0x8] sm:$0xff]
    %v276 = vld [vmem:[%s0 + $0x10] sm:$0xff]
    %v277 = vld [vmem:[%s0 + $0x18] sm:$0xff]
    %v278 = vld [vmem:[%s0 + $0x20] sm:$0xff]
    %v279 = vld [vmem:[%s0 + $0x28] sm:$0xff]
    %v280 = vld [vmem:[%s0 + $0x30] sm:$0xff]
    %v281 = vld [vmem:[%s0 + $0x38] sm:$0xff]
    %v282 = vld [vmem:[#allocation2] sm:$0xff]
    %v283 = vld [vmem:[#allocation2 + $0x8] sm:$0xff]
    %v284 = vld [vmem:[#allocation2 + $0x10] sm:$0xff]
    %v285 = vld [vmem:[#allocation2 + $0x18] sm:$0xff]
    %vm286 = vcmask 261120
    %v288 = vsel %vm286, %v282, 0
    %v291 = vsel %vm286, %v283, 0
    %v294 = vsel %vm286, %v284, 0
    %v297 = vsel %vm286, %v285, 0
    %299 = vmatpush.msra.mxu0 0.0
    %300 = vmatpush.msra.mxu0 0.0
    %301 = vmatpush.msra.mxu0 0.0
    %302 = vmatpush.msra.mxu0 0.0
    %303 = vmatpush.msra.mxu0 0.0
    %304 = vmatpush.msra.mxu0 0.0
    %305 = vmatpush.msra.mxu0 0.0
    %306 = vmatpush.msra.mxu0 0.0
    %307 = vmatpush.msra.mxu0 0.0
    %308 = vmatpush.msra.mxu0 0.0
    %309 = vmatpush.msra.mxu0 0.0
    %310 = vmatpush.msra.mxu0 0.0
    %311 = vmatpush.msra.mxu0 %v280
    %312 = vmatpush.msra.mxu0 %v278
    %313 = vmatpush.msra.mxu0 %v276
    %314 = vmatpush.msra.mxu0 %v274
    %315 = vmatmul.f32.gmra.mxu0 %v288
    %v316 = vpop.f32.mrf.mxu0
    %v317 = vadd.f32 0.0, %v316
    %318 = vmatmul.f32.gmra.mxu0 %v291
    %v319 = vpop.f32.mrf.mxu0
    %v320 = vadd.f32 0.0, %v319
    %321 = vmatmul.f32.gmra.mxu0 %v294
    %v322 = vpop.f32.mrf.mxu0
    %v323 = vadd.f32 0.0, %v322
    %324 = vmatmul.f32.gmra.mxu0 %v297
    %v325 = vpop.f32.mrf.mxu0
    %v326 = vadd.f32 0.0, %v325
    %327 = vdwg.mxu0
    %328 = vmatpush.msra.mxu0 0.0
    %329 = vmatpush.msra.mxu0 0.0
    %330 = vmatpush.msra.mxu0 0.0
    %331 = vmatpush.msra.mxu0 0.0
    %332 = vmatpush.msra.mxu0 0.0
    %333 = vmatpush.msra.mxu0 0.0
    %334 = vmatpush.msra.mxu0 0.0
    %335 = vmatpush.msra.mxu0 0.0
    %336 = vmatpush.msra.mxu0 0.0
    %337 = vmatpush.msra.mxu0 0.0
    %338 = vmatpush.msra.mxu0 0.0
    %339 = vmatpush.msra.mxu0 0.0
    %340 = vmatpush.msra.mxu0 %v281
    %341 = vmatpush.msra.mxu0 %v279
    %342 = vmatpush.msra.mxu0 %v277
    %343 = vmatpush.msra.mxu0 %v275
    %344 = vmatmul.f32.gmra.mxu0 %v288
    %v345 = vpop.f32.mrf.mxu0
    %v346 = vadd.f32 0.0, %v345
    %347 = vmatmul.f32.gmra.mxu0 %v291
    %v348 = vpop.f32.mrf.mxu0
    %v349 = vadd.f32 0.0, %v348
    %350 = vmatmul.f32.gmra.mxu0 %v294
    %v351 = vpop.f32.mrf.mxu0
    %v352 = vadd.f32 0.0, %v351
    %353 = vmatmul.f32.gmra.mxu0 %v297
    %v354 = vpop.f32.mrf.mxu0
    %v355 = vadd.f32 0.0, %v354
    %356 = vdwg.mxu0
    %v357 = vld [vmem:[#allocation4] sm:$0xff]
    %v358 = vld [vmem:[#allocation4 + $0x8] sm:$0xff]
    %v359 = vld [vmem:[#allocation4 + $0x10] sm:$0xff]
    %v360 = vld [vmem:[#allocation4 + $0x18] sm:$0xff]
    %v361 = vld [vmem:[#allocation4 + $0x20] sm:$0xff]
    %v362 = vld [vmem:[#allocation4 + $0x28] sm:$0xff]
    %v363 = vld [vmem:[#allocation4 + $0x30] sm:$0xff]
    %v364 = vld [vmem:[#allocation4 + $0x38] sm:$0xff]
    %v365 = vld [vmem:[#allocation4 + $0x40] sm:$0xff]
    %v366 = vld [vmem:[#allocation4 + $0x48] sm:$0xff]
    %v367 = vld [vmem:[#allocation4 + $0x50] sm:$0xff]
    %v368 = vld [vmem:[#allocation4 + $0x58] sm:$0xff]
    %v369 = vld [vmem:[#allocation4 + $0x60] sm:$0xff]
    %v370 = vld [vmem:[#allocation4 + $0x68] sm:$0xff]
    %v371 = vld [vmem:[#allocation4 + $0x70] sm:$0xff]
    %v372 = vld [vmem:[#allocation4 + $0x78] sm:$0xff]
    %v373 = vld [vmem:[#allocation4 + $0x80] sm:$0xff]
    %v374 = vld [vmem:[#allocation4 + $0x88] sm:$0xff]
    %v375 = vld [vmem:[#allocation4 + $0x90] sm:$0xff]
    %v376 = vld [vmem:[#allocation4 + $0x98] sm:$0xff]
    %v377 = vld [vmem:[#allocation4 + $0xa0] sm:$0xff]
    %v378 = vld [vmem:[#allocation4 + $0xa8] sm:$0xff]
    %v379 = vld [vmem:[#allocation4 + $0xb0] sm:$0xff]
    %v380 = vld [vmem:[#allocation4 + $0xb8] sm:$0xff]
    %v381 = vld [vmem:[#allocation4 + $0xc0] sm:$0xff]
    %v382 = vld [vmem:[#allocation4 + $0xc8] sm:$0xff]
    %v383 = vld [vmem:[#allocation4 + $0xd0] sm:$0xff]
    %v384 = vld [vmem:[#allocation4 + $0xd8] sm:$0xff]
    %v385 = vld [vmem:[#allocation4 + $0xe0] sm:$0xff]
    %v386 = vld [vmem:[#allocation4 + $0xe8] sm:$0xff]
    %v387 = vld [vmem:[#allocation4 + $0xf0] sm:$0xff]
    %v388 = vld [vmem:[#allocation4 + $0xf8] sm:$0xff]
    %v389 = vld [vmem:[#allocation4 + $0x100] sm:$0xff]
    %v390 = vld [vmem:[#allocation4 + $0x108] sm:$0xff]
    %v391 = vld [vmem:[#allocation4 + $0x110] sm:$0xff]
    %v392 = vld [vmem:[#allocation4 + $0x118] sm:$0xff]
    %v393 = vld [vmem:[#allocation4 + $0x120] sm:$0xff]
    %v394 = vld [vmem:[#allocation4 + $0x128] sm:$0xff]
    %v395 = vld [vmem:[#allocation4 + $0x130] sm:$0xff]
    %v396 = vld [vmem:[#allocation4 + $0x138] sm:$0xff]
    %v397 = vld [vmem:[#allocation4 + $0x140] sm:$0xff]
    %v398 = vld [vmem:[#allocation4 + $0x148] sm:$0xff]
    %v399 = vld [vmem:[#allocation4 + $0x150] sm:$0xff]
    %v400 = vld [vmem:[#allocation4 + $0x158] sm:$0xff]
    %v401 = vld [vmem:[#allocation4 + $0x160] sm:$0xff]
    %v402 = vld [vmem:[#allocation4 + $0x168] sm:$0xff]
    %v403 = vld [vmem:[#allocation4 + $0x170] sm:$0xff]
    %v404 = vld [vmem:[#allocation4 + $0x178] sm:$0xff]
    %v405 = vld [vmem:[#allocation4 + $0x180] sm:$0xff]
    %v406 = vld [vmem:[#allocation4 + $0x188] sm:$0xff]
    %v407 = vld [vmem:[#allocation4 + $0x190] sm:$0xff]
    %v408 = vld [vmem:[#allocation4 + $0x198] sm:$0xff]
    %v409 = vld [vmem:[#allocation4 + $0x1a0] sm:$0xff]
    %v410 = vld [vmem:[#allocation4 + $0x1a8] sm:$0xff]
    %v411 = vld [vmem:[#allocation4 + $0x1b0] sm:$0xff]
    %v412 = vld [vmem:[#allocation4 + $0x1b8] sm:$0xff]
    %v413 = vld [vmem:[#allocation4 + $0x1c0] sm:$0xff]
    %v414 = vld [vmem:[#allocation4 + $0x1c8] sm:$0xff]
    %v415 = vld [vmem:[#allocation4 + $0x1d0] sm:$0xff]
    %v416 = vld [vmem:[#allocation4 + $0x1d8] sm:$0xff]
    %v417 = vld [vmem:[#allocation4 + $0x1e0] sm:$0xff]
    %v418 = vld [vmem:[#allocation4 + $0x1e8] sm:$0xff]
    %v419 = vld [vmem:[#allocation4 + $0x1f0] sm:$0xff]
    %v420 = vld [vmem:[#allocation4 + $0x1f8] sm:$0xff]
    %421 = vmatpush.msra.mxu0 %v387
    %422 = vmatpush.msra.mxu0 %v385
    %423 = vmatpush.msra.mxu0 %v383
    %424 = vmatpush.msra.mxu0 %v381
    %425 = vmatpush.msra.mxu0 %v379
    %426 = vmatpush.msra.mxu0 %v377
    %427 = vmatpush.msra.mxu0 %v375
    %428 = vmatpush.msra.mxu0 %v373
    %429 = vmatpush.msra.mxu0 %v371
    %430 = vmatpush.msra.mxu0 %v369
    %431 = vmatpush.msra.mxu0 %v367
    %432 = vmatpush.msra.mxu0 %v365
    %433 = vmatpush.msra.mxu0 %v363
    %434 = vmatpush.msra.mxu0 %v361
    %435 = vmatpush.msra.mxu0 %v359
    %436 = vmatpush.msra.mxu0 %v357
    %437 = vmatmul.f32.gmra.mxu0 %v317
    %v438 = vpop.f32.mrf.mxu0
    %v439 = vadd.f32 0.0, %v438
    %440 = vmatmul.f32.gmra.mxu0 %v320
    %v441 = vpop.f32.mrf.mxu0
    %v442 = vadd.f32 0.0, %v441
    %443 = vmatmul.f32.gmra.mxu0 %v323
    %v444 = vpop.f32.mrf.mxu0
    %v445 = vadd.f32 0.0, %v444
    %446 = vmatmul.f32.gmra.mxu0 %v326
    %v447 = vpop.f32.mrf.mxu0
    %v448 = vadd.f32 0.0, %v447
    %449 = vdwg.mxu0
    %450 = vmatpush.msra.mxu0 %v419
    %451 = vmatpush.msra.mxu0 %v417
    %452 = vmatpush.msra.mxu0 %v415
    %453 = vmatpush.msra.mxu0 %v413
    %454 = vmatpush.msra.mxu0 %v411
    %455 = vmatpush.msra.mxu0 %v409
    %456 = vmatpush.msra.mxu0 %v407
    %457 = vmatpush.msra.mxu0 %v405
    %458 = vmatpush.msra.mxu0 %v403
    %459 = vmatpush.msra.mxu0 %v401
    %460 = vmatpush.msra.mxu0 %v399
    %461 = vmatpush.msra.mxu0 %v397
    %462 = vmatpush.msra.mxu0 %v395
    %463 = vmatpush.msra.mxu0 %v393
    %464 = vmatpush.msra.mxu0 %v391
    %465 = vmatpush.msra.mxu0 %v389
    %466 = vmatmul.f32.gmra.mxu0 %v346
    %v467 = vpop.f32.mrf.mxu0
    %v468 = vadd.f32 %v439, %v467
    %469 = vmatmul.f32.gmra.mxu0 %v349
    %v470 = vpop.f32.mrf.mxu0
    %v471 = vadd.f32 %v442, %v470
    %472 = vmatmul.f32.gmra.mxu0 %v352
    %v473 = vpop.f32.mrf.mxu0
    %v474 = vadd.f32 %v445, %v473
    %475 = vmatmul.f32.gmra.mxu0 %v355
    %v476 = vpop.f32.mrf.mxu0
    %v477 = vadd.f32 %v448, %v476
    %478 = vdwg.mxu0
    %479 = vmatpush.msra.mxu0 %v388
    %480 = vmatpush.msra.mxu0 %v386
    %481 = vmatpush.msra.mxu0 %v384
    %482 = vmatpush.msra.mxu0 %v382
    %483 = vmatpush.msra.mxu0 %v380
    %484 = vmatpush.msra.mxu0 %v378
    %485 = vmatpush.msra.mxu0 %v376
    %486 = vmatpush.msra.mxu0 %v374
    %487 = vmatpush.msra.mxu0 %v372
    %488 = vmatpush.msra.mxu0 %v370
    %489 = vmatpush.msra.mxu0 %v368
    %490 = vmatpush.msra.mxu0 %v366
    %491 = vmatpush.msra.mxu0 %v364
    %492 = vmatpush.msra.mxu0 %v362
    %493 = vmatpush.msra.mxu0 %v360
    %494 = vmatpush.msra.mxu0 %v358
    %495 = vmatmul.f32.gmra.mxu0 %v317
    %v496 = vpop.f32.mrf.mxu0
    %v497 = vadd.f32 0.0, %v496
    %498 = vmatmul.f32.gmra.mxu0 %v320
    %v499 = vpop.f32.mrf.mxu0
    %v500 = vadd.f32 0.0, %v499
    %501 = vmatmul.f32.gmra.mxu0 %v323
    %v502 = vpop.f32.mrf.mxu0
    %v503 = vadd.f32 0.0, %v502
    %504 = vmatmul.f32.gmra.mxu0 %v326
    %v505 = vpop.f32.mrf.mxu0
    %v506 = vadd.f32 0.0, %v505
    %507 = vdwg.mxu0
    %508 = vmatpush.msra.mxu0 %v420
    %509 = vmatpush.msra.mxu0 %v418
    %510 = vmatpush.msra.mxu0 %v416
    %511 = vmatpush.msra.mxu0 %v414
    %512 = vmatpush.msra.mxu0 %v412
    %513 = vmatpush.msra.mxu0 %v410
    %514 = vmatpush.msra.mxu0 %v408
    %515 = vmatpush.msra.mxu0 %v406
    %516 = vmatpush.msra.mxu0 %v404
    %517 = vmatpush.msra.mxu0 %v402
    %518 = vmatpush.msra.mxu0 %v400
    %519 = vmatpush.msra.mxu0 %v398
    %520 = vmatpush.msra.mxu0 %v396
    %521 = vmatpush.msra.mxu0 %v394
    %522 = vmatpush.msra.mxu0 %v392
    %523 = vmatpush.msra.mxu0 %v390
    %524 = vmatmul.f32.gmra.mxu0 %v346
    %v525 = vpop.f32.mrf.mxu0
    %v526 = vadd.f32 %v497, %v525
    %527 = vmatmul.f32.gmra.mxu0 %v349
    %v528 = vpop.f32.mrf.mxu0
    %v529 = vadd.f32 %v500, %v528
    %530 = vmatmul.f32.gmra.mxu0 %v352
    %v531 = vpop.f32.mrf.mxu0
    %v532 = vadd.f32 %v503, %v531
    %533 = vmatmul.f32.gmra.mxu0 %v355
    %v534 = vpop.f32.mrf.mxu0
    %v535 = vadd.f32 %v506, %v534
    %536 = vdwg.mxu0
    %v537 = vld [vmem:[#allocation6] sm:$0xff]
    %v538 = vld [vmem:[#allocation6 + $0x8] sm:$0xff]
    %v539 = vld [vmem:[#allocation6 + $0x10] sm:$0xff]
    %v540 = vld [vmem:[#allocation6 + $0x18] sm:$0xff]
    %v541 = vld [vmem:[#allocation6 + $0x20] sm:$0xff]
    %v542 = vld [vmem:[#allocation6 + $0x28] sm:$0xff]
    %v543 = vld [vmem:[#allocation6 + $0x30] sm:$0xff]
    %v544 = vld [vmem:[#allocation6 + $0x38] sm:$0xff]
    %v545 = vmul.f32 %v537, %v468
    %v546 = vmul.f32 %v538, %v526
    %v547 = vmul.f32 %v539, %v471
    %v548 = vmul.f32 %v540, %v529
    %v549 = vmul.f32 %v541, %v474
    %v550 = vmul.f32 %v542, %v532
    %v551 = vmul.f32 %v543, %v477
    %v552 = vmul.f32 %v544, %v535
    %v553 = vld [vmem:[#allocation7] sm:$0xff]
    %v554 = vld [vmem:[#allocation7 + $0x8] sm:$0xff]
    %v555 = vld [vmem:[#allocation7 + $0x10] sm:$0xff]
    %v556 = vld [vmem:[#allocation7 + $0x18] sm:$0xff]
    %v557 = vld [vmem:[#allocation7 + $0x20] sm:$0xff]
    %v558 = vld [vmem:[#allocation7 + $0x28] sm:$0xff]
    %v559 = vld [vmem:[#allocation7 + $0x30] sm:$0xff]
    %v560 = vld [vmem:[#allocation7 + $0x38] sm:$0xff]
    %v561 = vadd.f32 %v545, %v553
    %v562 = vadd.f32 %v546, %v554
    %v563 = vadd.f32 %v547, %v555
    %v564 = vadd.f32 %v548, %v556
    %v565 = vadd.f32 %v549, %v557
    %v566 = vadd.f32 %v550, %v558
    %v567 = vadd.f32 %v551, %v559
    %v568 = vadd.f32 %v552, %v560
    %v569 = vtanh.pop %v561
    %v570 = vtanh.pop %v562
    %v571 = vtanh.pop %v563
    %v572 = vtanh.pop %v564
    %v573 = vtanh.pop %v565
    %v574 = vtanh.pop %v566
    %v575 = vtanh.pop %v567
    %v576 = vtanh.pop %v568
    %v577 = vld [vmem:[#allocation9] sm:$0xff]
    %v578 = vld [vmem:[#allocation9 + $0x8] sm:$0xff]
    %v579 = vld [vmem:[#allocation9 + $0x10] sm:$0xff]
    %v580 = vld [vmem:[#allocation9 + $0x18] sm:$0xff]
    %v582 = vsel %vm286, %v577, 0
    %v585 = vsel %vm286, %v578, 0
    %v588 = vsel %vm286, %v579, 0
    %v591 = vsel %vm286, %v580, 0
    %593 = vmatpush.msra.mxu0 0.0
    %594 = vmatpush.msra.mxu0 0.0
    %595 = vmatpush.msra.mxu0 0.0
    %596 = vmatpush.msra.mxu0 0.0
    %597 = vmatpush.msra.mxu0 0.0
    %598 = vmatpush.msra.mxu0 0.0
    %599 = vmatpush.msra.mxu0 0.0
    %600 = vmatpush.msra.mxu0 0.0
    %601 = vmatpush.msra.mxu0 0.0
    %602 = vmatpush.msra.mxu0 0.0
    %603 = vmatpush.msra.mxu0 0.0
    %604 = vmatpush.msra.mxu0 0.0
    %605 = vmatpush.msra.mxu0 %v575
    %606 = vmatpush.msra.mxu0 %v573
    %607 = vmatpush.msra.mxu0 %v571
    %608 = vmatpush.msra.mxu0 %v569
    %609 = vmatmul.f32.gmra.mxu0 %v582
    %v610 = vpop.f32.mrf.mxu0
    %v611 = vadd.f32 0.0, %v610
    %612 = vmatmul.f32.gmra.mxu0 %v585
    %v613 = vpop.f32.mrf.mxu0
    %v614 = vadd.f32 0.0, %v613
    %615 = vmatmul.f32.gmra.mxu0 %v588
    %v616 = vpop.f32.mrf.mxu0
    %v617 = vadd.f32 0.0, %v616
    %618 = vmatmul.f32.gmra.mxu0 %v591
    %v619 = vpop.f32.mrf.mxu0
    %v620 = vadd.f32 0.0, %v619
    %621 = vdwg.mxu0
    %622 = vmatpush.msra.mxu0 0.0
    %623 = vmatpush.msra.mxu0 0.0
    %624 = vmatpush.msra.mxu0 0.0
    %625 = vmatpush.msra.mxu0 0.0
    %626 = vmatpush.msra.mxu0 0.0
    %627 = vmatpush.msra.mxu0 0.0
    %628 = vmatpush.msra.mxu0 0.0
    %629 = vmatpush.msra.mxu0 0.0
    %630 = vmatpush.msra.mxu0 0.0
    %631 = vmatpush.msra.mxu0 0.0
    %632 = vmatpush.msra.mxu0 0.0
    %633 = vmatpush.msra.mxu0 0.0
    %634 = vmatpush.msra.mxu0 %v576
    %635 = vmatpush.msra.mxu0 %v574
    %636 = vmatpush.msra.mxu0 %v572
    %637 = vmatpush.msra.mxu0 %v570
    %638 = vmatmul.f32.gmra.mxu0 %v582
    %v639 = vpop.f32.mrf.mxu0
    %v640 = vadd.f32 0.0, %v639
    %641 = vmatmul.f32.gmra.mxu0 %v585
    %v642 = vpop.f32.mrf.mxu0
    %v643 = vadd.f32 0.0, %v642
    %644 = vmatmul.f32.gmra.mxu0 %v588
    %v645 = vpop.f32.mrf.mxu0
    %v646 = vadd.f32 0.0, %v645
    %647 = vmatmul.f32.gmra.mxu0 %v591
    %v648 = vpop.f32.mrf.mxu0
    %v649 = vadd.f32 0.0, %v648
    %650 = vdwg.mxu0
    %v651 = vld [vmem:[#allocation10] sm:$0xff]
    %v652 = vld [vmem:[#allocation10 + $0x8] sm:$0xff]
    %v653 = vld [vmem:[#allocation10 + $0x10] sm:$0xff]
    %v654 = vld [vmem:[#allocation10 + $0x18] sm:$0xff]
    %v655 = vld [vmem:[#allocation10 + $0x20] sm:$0xff]
    %v656 = vld [vmem:[#allocation10 + $0x28] sm:$0xff]
    %v657 = vld [vmem:[#allocation10 + $0x30] sm:$0xff]
    %v658 = vld [vmem:[#allocation10 + $0x38] sm:$0xff]
    %v659 = vld [vmem:[#allocation10 + $0x40] sm:$0xff]
    %v660 = vld [vmem:[#allocation10 + $0x48] sm:$0xff]
    %v661 = vld [vmem:[#allocation10 + $0x50] sm:$0xff]
    %v662 = vld [vmem:[#allocation10 + $0x58] sm:$0xff]
    %v663 = vld [vmem:[#allocation10 + $0x60] sm:$0xff]
    %v664 = vld [vmem:[#allocation10 + $0x68] sm:$0xff]
    %v665 = vld [vmem:[#allocation10 + $0x70] sm:$0xff]
    %v666 = vld [vmem:[#allocation10 + $0x78] sm:$0xff]
    %v667 = vld [vmem:[#allocation10 + $0x80] sm:$0xff]
    %v668 = vld [vmem:[#allocation10 + $0x88] sm:$0xff]
    %v669 = vld [vmem:[#allocation10 + $0x90] sm:$0xff]
    %v670 = vld [vmem:[#allocation10 + $0x98] sm:$0xff]
    %v671 = vld [vmem:[#allocation10 + $0xa0] sm:$0xff]
    %v672 = vld [vmem:[#allocation10 + $0xa8] sm:$0xff]
    %v673 = vld [vmem:[#allocation10 + $0xb0] sm:$0xff]
    %v674 = vld [vmem:[#allocation10 + $0xb8] sm:$0xff]
    %v675 = vld [vmem:[#allocation10 + $0xc0] sm:$0xff]
    %v676 = vld [vmem:[#allocation10 + $0xc8] sm:$0xff]
    %v677 = vld [vmem:[#allocation10 + $0xd0] sm:$0xff]
    %v678 = vld [vmem:[#allocation10 + $0xd8] sm:$0xff]
    %v679 = vld [vmem:[#allocation10 + $0xe0] sm:$0xff]
    %v680 = vld [vmem:[#allocation10 + $0xe8] sm:$0xff]
    %v681 = vld [vmem:[#allocation10 + $0xf0] sm:$0xff]
    %v682 = vld [vmem:[#allocation10 + $0xf8] sm:$0xff]
    %v683 = vld [vmem:[#allocation10 + $0x100] sm:$0xff]
    %v684 = vld [vmem:[#allocation10 + $0x108] sm:$0xff]
    %v685 = vld [vmem:[#allocation10 + $0x110] sm:$0xff]
    %v686 = vld [vmem:[#allocation10 + $0x118] sm:$0xff]
    %v687 = vld [vmem:[#allocation10 + $0x120] sm:$0xff]
    %v688 = vld [vmem:[#allocation10 + $0x128] sm:$0xff]
    %v689 = vld [vmem:[#allocation10 + $0x130] sm:$0xff]
    %v690 = vld [vmem:[#allocation10 + $0x138] sm:$0xff]
    %v691 = vld [vmem:[#allocation10 + $0x140] sm:$0xff]
    %v692 = vld [vmem:[#allocation10 + $0x148] sm:$0xff]
    %v693 = vld [vmem:[#allocation10 + $0x150] sm:$0xff]
    %v694 = vld [vmem:[#allocation10 + $0x158] sm:$0xff]
    %v695 = vld [vmem:[#allocation10 + $0x160] sm:$0xff]
    %v696 = vld [vmem:[#allocation10 + $0x168] sm:$0xff]
    %v697 = vld [vmem:[#allocation10 + $0x170] sm:$0xff]
    %v698 = vld [vmem:[#allocation10 + $0x178] sm:$0xff]
    %v699 = vld [vmem:[#allocation10 + $0x180] sm:$0xff]
    %v700 = vld [vmem:[#allocation10 + $0x188] sm:$0xff]
    %v701 = vld [vmem:[#allocation10 + $0x190] sm:$0xff]
    %v702 = vld [vmem:[#allocation10 + $0x198] sm:$0xff]
    %v703 = vld [vmem:[#allocation10 + $0x1a0] sm:$0xff]
    %v704 = vld [vmem:[#allocation10 + $0x1a8] sm:$0xff]
    %v705 = vld [vmem:[#allocation10 + $0x1b0] sm:$0xff]
    %v706 = vld [vmem:[#allocation10 + $0x1b8] sm:$0xff]
    %v707 = vld [vmem:[#allocation10 + $0x1c0] sm:$0xff]
    %v708 = vld [vmem:[#allocation10 + $0x1c8] sm:$0xff]
    %v709 = vld [vmem:[#allocation10 + $0x1d0] sm:$0xff]
    %v710 = vld [vmem:[#allocation10 + $0x1d8] sm:$0xff]
    %v711 = vld [vmem:[#allocation10 + $0x1e0] sm:$0xff]
    %v712 = vld [vmem:[#allocation10 + $0x1e8] sm:$0xff]
    %v713 = vld [vmem:[#allocation10 + $0x1f0] sm:$0xff]
    %v714 = vld [vmem:[#allocation10 + $0x1f8] sm:$0xff]
    %715 = vmatpush.msra.mxu0 %v681
    %716 = vmatpush.msra.mxu0 %v679
    %717 = vmatpush.msra.mxu0 %v677
    %718 = vmatpush.msra.mxu0 %v675
    %719 = vmatpush.msra.mxu0 %v673
    %720 = vmatpush.msra.mxu0 %v671
    %721 = vmatpush.msra.mxu0 %v669
    %722 = vmatpush.msra.mxu0 %v667
    %723 = vmatpush.msra.mxu0 %v665
    %724 = vmatpush.msra.mxu0 %v663
    %725 = vmatpush.msra.mxu0 %v661
    %726 = vmatpush.msra.mxu0 %v659
    %727 = vmatpush.msra.mxu0 %v657
    %728 = vmatpush.msra.mxu0 %v655
    %729 = vmatpush.msra.mxu0 %v653
    %730 = vmatpush.msra.mxu0 %v651
    %731 = vmatmul.f32.gmra.mxu0 %v611
    %v732 = vpop.f32.mrf.mxu0
    %v733 = vadd.f32 0.0, %v732
    %734 = vmatmul.f32.gmra.mxu0 %v614
    %v735 = vpop.f32.mrf.mxu0
    %v736 = vadd.f32 0.0, %v735
    %737 = vmatmul.f32.gmra.mxu0 %v617
    %v738 = vpop.f32.mrf.mxu0
    %v739 = vadd.f32 0.0, %v738
    %740 = vmatmul.f32.gmra.mxu0 %v620
    %v741 = vpop.f32.mrf.mxu0
    %v742 = vadd.f32 0.0, %v741
    %743 = vdwg.mxu0
    %744 = vmatpush.msra.mxu0 %v713
    %745 = vmatpush.msra.mxu0 %v711
    %746 = vmatpush.msra.mxu0 %v709
    %747 = vmatpush.msra.mxu0 %v707
    %748 = vmatpush.msra.mxu0 %v705
    %749 = vmatpush.msra.mxu0 %v703
    %750 = vmatpush.msra.mxu0 %v701
    %751 = vmatpush.msra.mxu0 %v699
    %752 = vmatpush.msra.mxu0 %v697
    %753 = vmatpush.msra.mxu0 %v695
    %754 = vmatpush.msra.mxu0 %v693
    %755 = vmatpush.msra.mxu0 %v691
    %756 = vmatpush.msra.mxu0 %v689
    %757 = vmatpush.msra.mxu0 %v687
    %758 = vmatpush.msra.mxu0 %v685
    %759 = vmatpush.msra.mxu0 %v683
    %760 = vmatmul.f32.gmra.mxu0 %v640
    %v761 = vpop.f32.mrf.mxu0
    %v762 = vadd.f32 %v733, %v761
    %763 = vmatmul.f32.gmra.mxu0 %v643
    %v764 = vpop.f32.mrf.mxu0
    %v765 = vadd.f32 %v736, %v764
    %766 = vmatmul.f32.gmra.mxu0 %v646
    %v767 = vpop.f32.mrf.mxu0
    %v768 = vadd.f32 %v739, %v767
    %769 = vmatmul.f32.gmra.mxu0 %v649
    %v770 = vpop.f32.mrf.mxu0
    %v771 = vadd.f32 %v742, %v770
    %772 = vdwg.mxu0
    %773 = vmatpush.msra.mxu0 %v682
    %774 = vmatpush.msra.mxu0 %v680
    %775 = vmatpush.msra.mxu0 %v678
    %776 = vmatpush.msra.mxu0 %v676
    %777 = vmatpush.msra.mxu0 %v674
    %778 = vmatpush.msra.mxu0 %v672
    %779 = vmatpush.msra.mxu0 %v670
    %780 = vmatpush.msra.mxu0 %v668
    %781 = vmatpush.msra.mxu0 %v666
    %782 = vmatpush.msra.mxu0 %v664
    %783 = vmatpush.msra.mxu0 %v662
    %784 = vmatpush.msra.mxu0 %v660
    %785 = vmatpush.msra.mxu0 %v658
    %786 = vmatpush.msra.mxu0 %v656
    %787 = vmatpush.msra.mxu0 %v654
    %788 = vmatpush.msra.mxu0 %v652
    %789 = vmatmul.f32.gmra.mxu0 %v611
    %v790 = vpop.f32.mrf.mxu0
    %v791 = vadd.f32 0.0, %v790
    %792 = vmatmul.f32.gmra.mxu0 %v614
    %v793 = vpop.f32.mrf.mxu0
    %v794 = vadd.f32 0.0, %v793
    %795 = vmatmul.f32.gmra.mxu0 %v617
    %v796 = vpop.f32.mrf.mxu0
    %v797 = vadd.f32 0.0, %v796
    %798 = vmatmul.f32.gmra.mxu0 %v620
    %v799 = vpop.f32.mrf.mxu0
    %v800 = vadd.f32 0.0, %v799
    %801 = vdwg.mxu0
    %802 = vmatpush.msra.mxu0 %v714
    %803 = vmatpush.msra.mxu0 %v712
    %804 = vmatpush.msra.mxu0 %v710
    %805 = vmatpush.msra.mxu0 %v708
    %806 = vmatpush.msra.mxu0 %v706
    %807 = vmatpush.msra.mxu0 %v704
    %808 = vmatpush.msra.mxu0 %v702
    %809 = vmatpush.msra.mxu0 %v700
    %810 = vmatpush.msra.mxu0 %v698
    %811 = vmatpush.msra.mxu0 %v696
    %812 = vmatpush.msra.mxu0 %v694
    %813 = vmatpush.msra.mxu0 %v692
    %814 = vmatpush.msra.mxu0 %v690
    %815 = vmatpush.msra.mxu0 %v688
    %816 = vmatpush.msra.mxu0 %v686
    %817 = vmatpush.msra.mxu0 %v684
    %818 = vmatmul.f32.gmra.mxu0 %v640
    %v819 = vpop.f32.mrf.mxu0
    %v820 = vadd.f32 %v791, %v819
    %821 = vmatmul.f32.gmra.mxu0 %v643
    %v822 = vpop.f32.mrf.mxu0
    %v823 = vadd.f32 %v794, %v822
    %824 = vmatmul.f32.gmra.mxu0 %v646
    %v825 = vpop.f32.mrf.mxu0
    %v826 = vadd.f32 %v797, %v825
    %827 = vmatmul.f32.gmra.mxu0 %v649
    %v828 = vpop.f32.mrf.mxu0
    %v829 = vadd.f32 %v800, %v828
    %830 = vdwg.mxu0
    %v831 = vld [vmem:[#allocation12] sm:$0xff]
    %v832 = vld [vmem:[#allocation12 + $0x8] sm:$0xff]
    %v833 = vld [vmem:[#allocation12 + $0x10] sm:$0xff]
    %v834 = vld [vmem:[#allocation12 + $0x18] sm:$0xff]
    %v835 = vld [vmem:[#allocation12 + $0x20] sm:$0xff]
    %v836 = vld [vmem:[#allocation12 + $0x28] sm:$0xff]
    %v837 = vld [vmem:[#allocation12 + $0x30] sm:$0xff]
    %v838 = vld [vmem:[#allocation12 + $0x38] sm:$0xff]
    %v839 = vmul.f32 %v831, %v762
    %v840 = vmul.f32 %v832, %v820
    %v841 = vmul.f32 %v833, %v765
    %v842 = vmul.f32 %v834, %v823
    %v843 = vmul.f32 %v835, %v768
    %v844 = vmul.f32 %v836, %v826
    %v845 = vmul.f32 %v837, %v771
    %v846 = vmul.f32 %v838, %v829
    %v847 = vld [vmem:[#allocation13] sm:$0xff]
    %v848 = vld [vmem:[#allocation13 + $0x8] sm:$0xff]
    %v849 = vld [vmem:[#allocation13 + $0x10] sm:$0xff]
    %v850 = vld [vmem:[#allocation13 + $0x18] sm:$0xff]
    %v851 = vld [vmem:[#allocation13 + $0x20] sm:$0xff]
    %v852 = vld [vmem:[#allocation13 + $0x28] sm:$0xff]
    %v853 = vld [vmem:[#allocation13 + $0x30] sm:$0xff]
    %v854 = vld [vmem:[#allocation13 + $0x38] sm:$0xff]
    %v855 = vadd.f32 %v839, %v847
    %v856 = vadd.f32 %v840, %v848
    %v857 = vadd.f32 %v841, %v849
    %v858 = vadd.f32 %v842, %v850
    %v859 = vadd.f32 %v843, %v851
    %v860 = vadd.f32 %v844, %v852
    %v861 = vadd.f32 %v845, %v853
    %v862 = vadd.f32 %v846, %v854
    %v863 = vtanh.pop %v855
    %v864 = vtanh.pop %v856
    %v865 = vtanh.pop %v857
    %v866 = vtanh.pop %v858
    %v867 = vtanh.pop %v859
    %v868 = vtanh.pop %v860
    %v869 = vtanh.pop %v861
    %v870 = vtanh.pop %v862
    %v871 = vld [vmem:[#allocation15] sm:$0xff]
    %v872 = vld [vmem:[#allocation15 + $0x8] sm:$0xff]
    %v873 = vld [vmem:[#allocation15 + $0x10] sm:$0xff]
    %v874 = vld [vmem:[#allocation15 + $0x18] sm:$0xff]
    %v876 = vsel %vm286, %v871, 0
    %v879 = vsel %vm286, %v872, 0
    %v882 = vsel %vm286, %v873, 0
    %v885 = vsel %vm286, %v874, 0
    %887 = vmatpush.msra.mxu0 0.0
    %888 = vmatpush.msra.mxu0 0.0
    %889 = vmatpush.msra.mxu0 0.0
    %890 = vmatpush.msra.mxu0 0.0
    %891 = vmatpush.msra.mxu0 0.0
    %892 = vmatpush.msra.mxu0 0.0
    %893 = vmatpush.msra.mxu0 0.0
    %894 = vmatpush.msra.mxu0 0.0
    %895 = vmatpush.msra.mxu0 0.0
    %896 = vmatpush.msra.mxu0 0.0
    %897 = vmatpush.msra.mxu0 0.0
    %898 = vmatpush.msra.mxu0 0.0
    %899 = vmatpush.msra.mxu0 %v869
    %900 = vmatpush.msra.mxu0 %v867
    %901 = vmatpush.msra.mxu0 %v865
    %902 = vmatpush.msra.mxu0 %v863
    %903 = vmatmul.f32.gmra.mxu0 %v876
    %v904 = vpop.f32.mrf.mxu0
    %v905 = vadd.f32 0.0, %v904
    %906 = vmatmul.f32.gmra.mxu0 %v879
    %v907 = vpop.f32.mrf.mxu0
    %v908 = vadd.f32 0.0, %v907
    %909 = vmatmul.f32.gmra.mxu0 %v882
    %v910 = vpop.f32.mrf.mxu0
    %v911 = vadd.f32 0.0, %v910
    %912 = vmatmul.f32.gmra.mxu0 %v885
    %v913 = vpop.f32.mrf.mxu0
    %v914 = vadd.f32 0.0, %v913
    %915 = vdwg.mxu0
    %916 = vmatpush.msra.mxu0 0.0
    %917 = vmatpush.msra.mxu0 0.0
    %918 = vmatpush.msra.mxu0 0.0
    %919 = vmatpush.msra.mxu0 0.0
    %920 = vmatpush.msra.mxu0 0.0
    %921 = vmatpush.msra.mxu0 0.0
    %922 = vmatpush.msra.mxu0 0.0
    %923 = vmatpush.msra.mxu0 0.0
    %924 = vmatpush.msra.mxu0 0.0
    %925 = vmatpush.msra.mxu0 0.0
    %926 = vmatpush.msra.mxu0 0.0
    %927 = vmatpush.msra.mxu0 0.0
    %928 = vmatpush.msra.mxu0 %v870
    %929 = vmatpush.msra.mxu0 %v868
    %930 = vmatpush.msra.mxu0 %v866
    %931 = vmatpush.msra.mxu0 %v864
    %932 = vmatmul.f32.gmra.mxu0 %v876
    %v933 = vpop.f32.mrf.mxu0
    %v934 = vadd.f32 0.0, %v933
    %935 = vmatmul.f32.gmra.mxu0 %v879
    %v936 = vpop.f32.mrf.mxu0
    %v937 = vadd.f32 0.0, %v936
    %938 = vmatmul.f32.gmra.mxu0 %v882
    %v939 = vpop.f32.mrf.mxu0
    %v940 = vadd.f32 0.0, %v939
    %941 = vmatmul.f32.gmra.mxu0 %v885
    %v942 = vpop.f32.mrf.mxu0
    %v943 = vadd.f32 0.0, %v942
    %944 = vdwg.mxu0
    %v945 = vld [vmem:[#allocation16] sm:$0xff]
    %v946 = vld [vmem:[#allocation16 + $0x8] sm:$0xff]
    %v947 = vld [vmem:[#allocation16 + $0x10] sm:$0xff]
    %v948 = vld [vmem:[#allocation16 + $0x18] sm:$0xff]
    %v949 = vld [vmem:[#allocation16 + $0x20] sm:$0xff]
    %v950 = vld [vmem:[#allocation16 + $0x28] sm:$0xff]
    %v951 = vld [vmem:[#allocation16 + $0x30] sm:$0xff]
    %v952 = vld [vmem:[#allocation16 + $0x38] sm:$0xff]
    %v953 = vld [vmem:[#allocation16 + $0x40] sm:$0xff]
    %v954 = vld [vmem:[#allocation16 + $0x48] sm:$0xff]
    %v955 = vld [vmem:[#allocation16 + $0x50] sm:$0xff]
    %v956 = vld [vmem:[#allocation16 + $0x58] sm:$0xff]
    %v957 = vld [vmem:[#allocation16 + $0x60] sm:$0xff]
    %v958 = vld [vmem:[#allocation16 + $0x68] sm:$0xff]
    %v959 = vld [vmem:[#allocation16 + $0x70] sm:$0xff]
    %v960 = vld [vmem:[#allocation16 + $0x78] sm:$0xff]
    %v961 = vld [vmem:[#allocation16 + $0x80] sm:$0xff]
    %v962 = vld [vmem:[#allocation16 + $0x88] sm:$0xff]
    %v963 = vld [vmem:[#allocation16 + $0x90] sm:$0xff]
    %v964 = vld [vmem:[#allocation16 + $0x98] sm:$0xff]
    %v965 = vld [vmem:[#allocation16 + $0xa0] sm:$0xff]
    %v966 = vld [vmem:[#allocation16 + $0xa8] sm:$0xff]
    %v967 = vld [vmem:[#allocation16 + $0xb0] sm:$0xff]
    %v968 = vld [vmem:[#allocation16 + $0xb8] sm:$0xff]
    %v969 = vld [vmem:[#allocation16 + $0xc0] sm:$0xff]
    %v970 = vld [vmem:[#allocation16 + $0xc8] sm:$0xff]
    %v971 = vld [vmem:[#allocation16 + $0xd0] sm:$0xff]
    %v972 = vld [vmem:[#allocation16 + $0xd8] sm:$0xff]
    %v973 = vld [vmem:[#allocation16 + $0xe0] sm:$0xff]
    %v974 = vld [vmem:[#allocation16 + $0xe8] sm:$0xff]
    %v975 = vld [vmem:[#allocation16 + $0xf0] sm:$0xff]
    %v976 = vld [vmem:[#allocation16 + $0xf8] sm:$0xff]
    %v977 = vld [vmem:[#allocation16 + $0x100] sm:$0xff]
    %v978 = vld [vmem:[#allocation16 + $0x108] sm:$0xff]
    %v979 = vld [vmem:[#allocation16 + $0x110] sm:$0xff]
    %v980 = vld [vmem:[#allocation16 + $0x118] sm:$0xff]
    %v981 = vld [vmem:[#allocation16 + $0x120] sm:$0xff]
    %v982 = vld [vmem:[#allocation16 + $0x128] sm:$0xff]
    %v983 = vld [vmem:[#allocation16 + $0x130] sm:$0xff]
    %v984 = vld [vmem:[#allocation16 + $0x138] sm:$0xff]
    %v985 = vld [vmem:[#allocation16 + $0x140] sm:$0xff]
    %v986 = vld [vmem:[#allocation16 + $0x148] sm:$0xff]
    %v987 = vld [vmem:[#allocation16 + $0x150] sm:$0xff]
    %v988 = vld [vmem:[#allocation16 + $0x158] sm:$0xff]
    %v989 = vld [vmem:[#allocation16 + $0x160] sm:$0xff]
    %v990 = vld [vmem:[#allocation16 + $0x168] sm:$0xff]
    %v991 = vld [vmem:[#allocation16 + $0x170] sm:$0xff]
    %v992 = vld [vmem:[#allocation16 + $0x178] sm:$0xff]
    %v993 = vld [vmem:[#allocation16 + $0x180] sm:$0xff]
    %v994 = vld [vmem:[#allocation16 + $0x188] sm:$0xff]
    %v995 = vld [vmem:[#allocation16 + $0x190] sm:$0xff]
    %v996 = vld [vmem:[#allocation16 + $0x198] sm:$0xff]
    %v997 = vld [vmem:[#allocation16 + $0x1a0] sm:$0xff]
    %v998 = vld [vmem:[#allocation16 + $0x1a8] sm:$0xff]
    %v999 = vld [vmem:[#allocation16 + $0x1b0] sm:$0xff]
    %v1000 = vld [vmem:[#allocation16 + $0x1b8] sm:$0xff]
    %v1001 = vld [vmem:[#allocation16 + $0x1c0] sm:$0xff]
    %v1002 = vld [vmem:[#allocation16 + $0x1c8] sm:$0xff]
    %v1003 = vld [vmem:[#allocation16 + $0x1d0] sm:$0xff]
    %v1004 = vld [vmem:[#allocation16 + $0x1d8] sm:$0xff]
    %v1005 = vld [vmem:[#allocation16 + $0x1e0] sm:$0xff]
    %v1006 = vld [vmem:[#allocation16 + $0x1e8] sm:$0xff]
    %v1007 = vld [vmem:[#allocation16 + $0x1f0] sm:$0xff]
    %v1008 = vld [vmem:[#allocation16 + $0x1f8] sm:$0xff]
    %1009 = vmatpush.msra.mxu0 %v975
    %1010 = vmatpush.msra.mxu0 %v973
    %1011 = vmatpush.msra.mxu0 %v971
    %1012 = vmatpush.msra.mxu0 %v969
    %1013 = vmatpush.msra.mxu0 %v967
    %1014 = vmatpush.msra.mxu0 %v965
    %1015 = vmatpush.msra.mxu0 %v963
    %1016 = vmatpush.msra.mxu0 %v961
    %1017 = vmatpush.msra.mxu0 %v959
    %1018 = vmatpush.msra.mxu0 %v957
    %1019 = vmatpush.msra.mxu0 %v955
    %1020 = vmatpush.msra.mxu0 %v953
    %1021 = vmatpush.msra.mxu0 %v951
    %1022 = vmatpush.msra.mxu0 %v949
    %1023 = vmatpush.msra.mxu0 %v947
    %1024 = vmatpush.msra.mxu0 %v945
    %1025 = vmatmul.f32.gmra.mxu0 %v905
    %v1026 = vpop.f32.mrf.mxu0
    %v1027 = vadd.f32 0.0, %v1026
    %1028 = vmatmul.f32.gmra.mxu0 %v908
    %v1029 = vpop.f32.mrf.mxu0
    %v1030 = vadd.f32 0.0, %v1029
    %1031 = vmatmul.f32.gmra.mxu0 %v911
    %v1032 = vpop.f32.mrf.mxu0
    %v1033 = vadd.f32 0.0, %v1032
    %1034 = vmatmul.f32.gmra.mxu0 %v914
    %v1035 = vpop.f32.mrf.mxu0
    %v1036 = vadd.f32 0.0, %v1035
    %1037 = vdwg.mxu0
    %1038 = vmatpush.msra.mxu0 %v1007
    %1039 = vmatpush.msra.mxu0 %v1005
    %1040 = vmatpush.msra.mxu0 %v1003
    %1041 = vmatpush.msra.mxu0 %v1001
    %1042 = vmatpush.msra.mxu0 %v999
    %1043 = vmatpush.msra.mxu0 %v997
    %1044 = vmatpush.msra.mxu0 %v995
    %1045 = vmatpush.msra.mxu0 %v993
    %1046 = vmatpush.msra.mxu0 %v991
    %1047 = vmatpush.msra.mxu0 %v989
    %1048 = vmatpush.msra.mxu0 %v987
    %1049 = vmatpush.msra.mxu0 %v985
    %1050 = vmatpush.msra.mxu0 %v983
    %1051 = vmatpush.msra.mxu0 %v981
    %1052 = vmatpush.msra.mxu0 %v979
    %1053 = vmatpush.msra.mxu0 %v977
    %1054 = vmatmul.f32.gmra.mxu0 %v934
    %v1055 = vpop.f32.mrf.mxu0
    %v1056 = vadd.f32 %v1027, %v1055
    %1057 = vmatmul.f32.gmra.mxu0 %v937
    %v1058 = vpop.f32.mrf.mxu0
    %v1059 = vadd.f32 %v1030, %v1058
    %1060 = vmatmul.f32.gmra.mxu0 %v940
    %v1061 = vpop.f32.mrf.mxu0
    %v1062 = vadd.f32 %v1033, %v1061
    %1063 = vmatmul.f32.gmra.mxu0 %v943
    %v1064 = vpop.f32.mrf.mxu0
    %v1065 = vadd.f32 %v1036, %v1064
    %1066 = vdwg.mxu0
    %1067 = vmatpush.msra.mxu0 %v976
    %1068 = vmatpush.msra.mxu0 %v974
    %1069 = vmatpush.msra.mxu0 %v972
    %1070 = vmatpush.msra.mxu0 %v970
    %1071 = vmatpush.msra.mxu0 %v968
    %1072 = vmatpush.msra.mxu0 %v966
    %1073 = vmatpush.msra.mxu0 %v964
    %1074 = vmatpush.msra.mxu0 %v962
    %1075 = vmatpush.msra.mxu0 %v960
    %1076 = vmatpush.msra.mxu0 %v958
    %1077 = vmatpush.msra.mxu0 %v956
    %1078 = vmatpush.msra.mxu0 %v954
    %1079 = vmatpush.msra.mxu0 %v952
    %1080 = vmatpush.msra.mxu0 %v950
    %1081 = vmatpush.msra.mxu0 %v948
    %1082 = vmatpush.msra.mxu0 %v946
    %1083 = vmatmul.f32.gmra.mxu0 %v905
    %v1084 = vpop.f32.mrf.mxu0
    %v1085 = vadd.f32 0.0, %v1084
    %1086 = vmatmul.f32.gmra.mxu0 %v908
    %v1087 = vpop.f32.mrf.mxu0
    %v1088 = vadd.f32 0.0, %v1087
    %1089 = vmatmul.f32.gmra.mxu0 %v911
    %v1090 = vpop.f32.mrf.mxu0
    %v1091 = vadd.f32 0.0, %v1090
    %1092 = vmatmul.f32.gmra.mxu0 %v914
    %v1093 = vpop.f32.mrf.mxu0
    %v1094 = vadd.f32 0.0, %v1093
    %1095 = vdwg.mxu0
    %1096 = vmatpush.msra.mxu0 %v1008
    %1097 = vmatpush.msra.mxu0 %v1006
    %1098 = vmatpush.msra.mxu0 %v1004
    %1099 = vmatpush.msra.mxu0 %v1002
    %1100 = vmatpush.msra.mxu0 %v1000
    %1101 = vmatpush.msra.mxu0 %v998
    %1102 = vmatpush.msra.mxu0 %v996
    %1103 = vmatpush.msra.mxu0 %v994
    %1104 = vmatpush.msra.mxu0 %v992
    %1105 = vmatpush.msra.mxu0 %v990
    %1106 = vmatpush.msra.mxu0 %v988
    %1107 = vmatpush.msra.mxu0 %v986
    %1108 = vmatpush.msra.mxu0 %v984
    %1109 = vmatpush.msra.mxu0 %v982
    %1110 = vmatpush.msra.mxu0 %v980
    %1111 = vmatpush.msra.mxu0 %v978
    %1112 = vmatmul.f32.gmra.mxu0 %v934
    %v1113 = vpop.f32.mrf.mxu0
    %v1114 = vadd.f32 %v1085, %v1113
    %1115 = vmatmul.f32.gmra.mxu0 %v937
    %v1116 = vpop.f32.mrf.mxu0
    %v1117 = vadd.f32 %v1088, %v1116
    %1118 = vmatmul.f32.gmra.mxu0 %v940
    %v1119 = vpop.f32.mrf.mxu0
    %v1120 = vadd.f32 %v1091, %v1119
    %1121 = vmatmul.f32.gmra.mxu0 %v943
    %v1122 = vpop.f32.mrf.mxu0
    %v1123 = vadd.f32 %v1094, %v1122
    %1124 = vdwg.mxu0
    %v1125 = vld [vmem:[#allocation18] sm:$0xff]
    %v1126 = vld [vmem:[#allocation18 + $0x8] sm:$0xff]
    %v1127 = vld [vmem:[#allocation18 + $0x10] sm:$0xff]
    %v1128 = vld [vmem:[#allocation18 + $0x18] sm:$0xff]
    %v1129 = vld [vmem:[#allocation18 + $0x20] sm:$0xff]
    %v1130 = vld [vmem:[#allocation18 + $0x28] sm:$0xff]
    %v1131 = vld [vmem:[#allocation18 + $0x30] sm:$0xff]
    %v1132 = vld [vmem:[#allocation18 + $0x38] sm:$0xff]
    %v1133 = vmul.f32 %v1125, %v1056
    %v1134 = vmul.f32 %v1126, %v1114
    %v1135 = vmul.f32 %v1127, %v1059
    %v1136 = vmul.f32 %v1128, %v1117
    %v1137 = vmul.f32 %v1129, %v1062
    %v1138 = vmul.f32 %v1130, %v1120
    %v1139 = vmul.f32 %v1131, %v1065
    %v1140 = vmul.f32 %v1132, %v1123
    %v1141 = vld [vmem:[#allocation19] sm:$0xff]
    %v1142 = vld [vmem:[#allocation19 + $0x8] sm:$0xff]
    %v1143 = vld [vmem:[#allocation19 + $0x10] sm:$0xff]
    %v1144 = vld [vmem:[#allocation19 + $0x18] sm:$0xff]
    %v1145 = vld [vmem:[#allocation19 + $0x20] sm:$0xff]
    %v1146 = vld [vmem:[#allocation19 + $0x28] sm:$0xff]
    %v1147 = vld [vmem:[#allocation19 + $0x30] sm:$0xff]
    %v1148 = vld [vmem:[#allocation19 + $0x38] sm:$0xff]
    %v1149 = vadd.f32 %v1133, %v1141
    %v1150 = vadd.f32 %v1134, %v1142
    %v1151 = vadd.f32 %v1135, %v1143
    %v1152 = vadd.f32 %v1136, %v1144
    %v1153 = vadd.f32 %v1137, %v1145
    %v1154 = vadd.f32 %v1138, %v1146
    %v1155 = vadd.f32 %v1139, %v1147
    %v1156 = vadd.f32 %v1140, %v1148
    %v1157 = vtanh.pop %v1149
    %v1158 = vtanh.pop %v1150
    %v1159 = vtanh.pop %v1151
    %v1160 = vtanh.pop %v1152
    %v1161 = vtanh.pop %v1153
    %v1162 = vtanh.pop %v1154
    %v1163 = vtanh.pop %v1155
    %v1164 = vtanh.pop %v1156
    %v1165 = vadd.f32 %v1157, %v569
    %v1166 = vadd.f32 %v1158, %v570
    %v1167 = vadd.f32 %v1159, %v571
    %v1168 = vadd.f32 %v1160, %v572
    %v1169 = vadd.f32 %v1161, %v573
    %v1170 = vadd.f32 %v1162, %v574
    %v1171 = vadd.f32 %v1163, %v575
    %v1172 = vadd.f32 %v1164, %v576
    %v1173 = vld [vmem:[#allocation21] sm:$0xff]
    %v1174 = vld [vmem:[#allocation21 + $0x8] sm:$0xff]
    %v1175 = vld [vmem:[#allocation21 + $0x10] sm:$0xff]
    %v1176 = vld [vmem:[#allocation21 + $0x18] sm:$0xff]
    %v1178 = vsel %vm286, %v1173, 0
    %v1181 = vsel %vm286, %v1174, 0
    %v1184 = vsel %vm286, %v1175, 0
    %v1187 = vsel %vm286, %v1176, 0
    %1189 = vmatpush.msra.mxu0 0.0
    %1190 = vmatpush.msra.mxu0 0.0
    %1191 = vmatpush.msra.mxu0 0.0
    %1192 = vmatpush.msra.mxu0 0.0
    %1193 = vmatpush.msra.mxu0 0.0
    %1194 = vmatpush.msra.mxu0 0.0
    %1195 = vmatpush.msra.mxu0 0.0
    %1196 = vmatpush.msra.mxu0 0.0
    %1197 = vmatpush.msra.mxu0 0.0
    %1198 = vmatpush.msra.mxu0 0.0
    %1199 = vmatpush.msra.mxu0 0.0
    %1200 = vmatpush.msra.mxu0 0.0
    %1201 = vmatpush.msra.mxu0 %v1171
    %1202 = vmatpush.msra.mxu0 %v1169
    %1203 = vmatpush.msra.mxu0 %v1167
    %1204 = vmatpush.msra.mxu0 %v1165
    %1205 = vmatmul.f32.gmra.mxu0 %v1178
    %v1206 = vpop.f32.mrf.mxu0
    %v1207 = vadd.f32 0.0, %v1206
    %1208 = vmatmul.f32.gmra.mxu0 %v1181
    %v1209 = vpop.f32.mrf.mxu0
    %v1210 = vadd.f32 0.0, %v1209
    %1211 = vmatmul.f32.gmra.mxu0 %v1184
    %v1212 = vpop.f32.mrf.mxu0
    %v1213 = vadd.f32 0.0, %v1212
    %1214 = vmatmul.f32.gmra.mxu0 %v1187
    %v1215 = vpop.f32.mrf.mxu0
    %v1216 = vadd.f32 0.0, %v1215
    %1217 = vdwg.mxu0
    %1218 = vmatpush.msra.mxu0 0.0
    %1219 = vmatpush.msra.mxu0 0.0
    %1220 = vmatpush.msra.mxu0 0.0
    %1221 = vmatpush.msra.mxu0 0.0
    %1222 = vmatpush.msra.mxu0 0.0
    %1223 = vmatpush.msra.mxu0 0.0
    %1224 = vmatpush.msra.mxu0 0.0
    %1225 = vmatpush.msra.mxu0 0.0
    %1226 = vmatpush.msra.mxu0 0.0
    %1227 = vmatpush.msra.mxu0 0.0
    %1228 = vmatpush.msra.mxu0 0.0
    %1229 = vmatpush.msra.mxu0 0.0
    %1230 = vmatpush.msra.mxu0 %v1172
    %1231 = vmatpush.msra.mxu0 %v1170
    %1232 = vmatpush.msra.mxu0 %v1168
    %1233 = vmatpush.msra.mxu0 %v1166
    %1234 = vmatmul.f32.gmra.mxu0 %v1178
    %v1235 = vpop.f32.mrf.mxu0
    %v1236 = vadd.f32 0.0, %v1235
    %1237 = vmatmul.f32.gmra.mxu0 %v1181
    %v1238 = vpop.f32.mrf.mxu0
    %v1239 = vadd.f32 0.0, %v1238
    %1240 = vmatmul.f32.gmra.mxu0 %v1184
    %v1241 = vpop.f32.mrf.mxu0
    %v1242 = vadd.f32 0.0, %v1241
    %1243 = vmatmul.f32.gmra.mxu0 %v1187
    %v1244 = vpop.f32.mrf.mxu0
    %v1245 = vadd.f32 0.0, %v1244
    %1246 = vdwg.mxu0
    %v1247 = vld [vmem:[%s14] sm:$0xff]
    %v1248 = vld [vmem:[%s14 + $0x8] sm:$0xff]
    %v1249 = vld [vmem:[%s14 + $0x10] sm:$0xff]
    %v1250 = vld [vmem:[%s14 + $0x18] sm:$0xff]
    %v1251 = vld [vmem:[%s14 + $0x20] sm:$0xff]
    %v1252 = vld [vmem:[%s14 + $0x28] sm:$0xff]
    %v1253 = vld [vmem:[%s14 + $0x30] sm:$0xff]
    %v1254 = vld [vmem:[%s14 + $0x38] sm:$0xff]
    %v1255 = vld [vmem:[%s14 + $0x40] sm:$0xff]
    %v1256 = vld [vmem:[%s14 + $0x48] sm:$0xff]
    %v1257 = vld [vmem:[%s14 + $0x50] sm:$0xff]
    %v1258 = vld [vmem:[%s14 + $0x58] sm:$0xff]
    %v1259 = vld [vmem:[%s14 + $0x60] sm:$0xff]
    %v1260 = vld [vmem:[%s14 + $0x68] sm:$0xff]
    %v1261 = vld [vmem:[%s14 + $0x70] sm:$0xff]
    %v1262 = vld [vmem:[%s14 + $0x78] sm:$0xff]
    %v1263 = vld [vmem:[%s14 + $0x80] sm:$0xff]
    %v1264 = vld [vmem:[%s14 + $0x88] sm:$0xff]
    %v1265 = vld [vmem:[%s14 + $0x90] sm:$0xff]
    %v1266 = vld [vmem:[%s14 + $0x98] sm:$0xff]
    %v1267 = vld [vmem:[%s14 + $0xa0] sm:$0xff]
    %v1268 = vld [vmem:[%s14 + $0xa8] sm:$0xff]
    %v1269 = vld [vmem:[%s14 + $0xb0] sm:$0xff]
    %v1270 = vld [vmem:[%s14 + $0xb8] sm:$0xff]
    %v1271 = vld [vmem:[%s14 + $0xc0] sm:$0xff]
    %v1272 = vld [vmem:[%s14 + $0xc8] sm:$0xff]
    %v1273 = vld [vmem:[%s14 + $0xd0] sm:$0xff]
    %v1274 = vld [vmem:[%s14 + $0xd8] sm:$0xff]
    %v1275 = vld [vmem:[%s14 + $0xe0] sm:$0xff]
    %v1276 = vld [vmem:[%s14 + $0xe8] sm:$0xff]
    %v1277 = vld [vmem:[%s14 + $0xf0] sm:$0xff]
    %v1278 = vld [vmem:[%s14 + $0xf8] sm:$0xff]
    %v1279 = vld [vmem:[%s14 + $0x100] sm:$0xff]
    %v1280 = vld [vmem:[%s14 + $0x108] sm:$0xff]
    %v1281 = vld [vmem:[%s14 + $0x110] sm:$0xff]
    %v1282 = vld [vmem:[%s14 + $0x118] sm:$0xff]
    %v1283 = vld [vmem:[%s14 + $0x120] sm:$0xff]
    %v1284 = vld [vmem:[%s14 + $0x128] sm:$0xff]
    %v1285 = vld [vmem:[%s14 + $0x130] sm:$0xff]
    %v1286 = vld [vmem:[%s14 + $0x138] sm:$0xff]
    %v1287 = vld [vmem:[%s14 + $0x140] sm:$0xff]
    %v1288 = vld [vmem:[%s14 + $0x148] sm:$0xff]
    %v1289 = vld [vmem:[%s14 + $0x150] sm:$0xff]
    %v1290 = vld [vmem:[%s14 + $0x158] sm:$0xff]
    %v1291 = vld [vmem:[%s14 + $0x160] sm:$0xff]
    %v1292 = vld [vmem:[%s14 + $0x168] sm:$0xff]
    %v1293 = vld [vmem:[%s14 + $0x170] sm:$0xff]
    %v1294 = vld [vmem:[%s14 + $0x178] sm:$0xff]
    %v1295 = vld [vmem:[%s14 + $0x180] sm:$0xff]
    %v1296 = vld [vmem:[%s14 + $0x188] sm:$0xff]
    %v1297 = vld [vmem:[%s14 + $0x190] sm:$0xff]
    %v1298 = vld [vmem:[%s14 + $0x198] sm:$0xff]
    %v1299 = vld [vmem:[%s14 + $0x1a0] sm:$0xff]
    %v1300 = vld [vmem:[%s14 + $0x1a8] sm:$0xff]
    %v1301 = vld [vmem:[%s14 + $0x1b0] sm:$0xff]
    %v1302 = vld [vmem:[%s14 + $0x1b8] sm:$0xff]
    %v1303 = vld [vmem:[%s14 + $0x1c0] sm:$0xff]
    %v1304 = vld [vmem:[%s14 + $0x1c8] sm:$0xff]
    %v1305 = vld [vmem:[%s14 + $0x1d0] sm:$0xff]
    %v1306 = vld [vmem:[%s14 + $0x1d8] sm:$0xff]
    %v1307 = vld [vmem:[%s14 + $0x1e0] sm:$0xff]
    %v1308 = vld [vmem:[%s14 + $0x1e8] sm:$0xff]
    %v1309 = vld [vmem:[%s14 + $0x1f0] sm:$0xff]
    %v1310 = vld [vmem:[%s14 + $0x1f8] sm:$0xff]
    %v1311 = vld [vmem:[#allocation22] sm:$0xff]
    %v1312 = vld [vmem:[#allocation22 + $0x8] sm:$0xff]
    %v1313 = vld [vmem:[#allocation22 + $0x10] sm:$0xff]
    %v1314 = vld [vmem:[#allocation22 + $0x18] sm:$0xff]
    %v1316 = vsel %vm286, %v1311, 0
    %v1319 = vsel %vm286, %v1312, 0
    %v1322 = vsel %vm286, %v1313, 0
    %v1325 = vsel %vm286, %v1314, 0
    %1327 = vmatpush.msra.mxu0 0.0
    %1328 = vmatpush.msra.mxu0 0.0
    %1329 = vmatpush.msra.mxu0 0.0
    %1330 = vmatpush.msra.mxu0 0.0
    %1331 = vmatpush.msra.mxu0 0.0
    %1332 = vmatpush.msra.mxu0 0.0
    %1333 = vmatpush.msra.mxu0 0.0
    %1334 = vmatpush.msra.mxu0 0.0
    %1335 = vmatpush.msra.mxu0 0.0
    %1336 = vmatpush.msra.mxu0 0.0
    %1337 = vmatpush.msra.mxu0 0.0
    %1338 = vmatpush.msra.mxu0 0.0
    %1339 = vmatpush.msra.mxu0 %v280
    %1340 = vmatpush.msra.mxu0 %v278
    %1341 = vmatpush.msra.mxu0 %v276
    %1342 = vmatpush.msra.mxu0 %v274
    %1343 = vmatmul.f32.gmra.mxu0 %v1316
    %v1344 = vpop.f32.mrf.mxu0
    %v1345 = vadd.f32 0.0, %v1344
    %1346 = vmatmul.f32.gmra.mxu0 %v1319
    %v1347 = vpop.f32.mrf.mxu0
    %v1348 = vadd.f32 0.0, %v1347
    %1349 = vmatmul.f32.gmra.mxu0 %v1322
    %v1350 = vpop.f32.mrf.mxu0
    %v1351 = vadd.f32 0.0, %v1350
    %1352 = vmatmul.f32.gmra.mxu0 %v1325
    %v1353 = vpop.f32.mrf.mxu0
    %v1354 = vadd.f32 0.0, %v1353
    %1355 = vdwg.mxu0
    %1356 = vmatpush.msra.mxu0 0.0
    %1357 = vmatpush.msra.mxu0 0.0
    %1358 = vmatpush.msra.mxu0 0.0
    %1359 = vmatpush.msra.mxu0 0.0
    %1360 = vmatpush.msra.mxu0 0.0
    %1361 = vmatpush.msra.mxu0 0.0
    %1362 = vmatpush.msra.mxu0 0.0
    %1363 = vmatpush.msra.mxu0 0.0
    %1364 = vmatpush.msra.mxu0 0.0
    %1365 = vmatpush.msra.mxu0 0.0
    %1366 = vmatpush.msra.mxu0 0.0
    %1367 = vmatpush.msra.mxu0 0.0
    %1368 = vmatpush.msra.mxu0 %v281
    %1369 = vmatpush.msra.mxu0 %v279
    %1370 = vmatpush.msra.mxu0 %v277
    %1371 = vmatpush.msra.mxu0 %v275
    %1372 = vmatmul.f32.gmra.mxu0 %v1316
    %v1373 = vpop.f32.mrf.mxu0
    %v1374 = vadd.f32 0.0, %v1373
    %1375 = vmatmul.f32.gmra.mxu0 %v1319
    %v1376 = vpop.f32.mrf.mxu0
    %v1377 = vadd.f32 0.0, %v1376
    %1378 = vmatmul.f32.gmra.mxu0 %v1322
    %v1379 = vpop.f32.mrf.mxu0
    %v1380 = vadd.f32 0.0, %v1379
    %1381 = vmatmul.f32.gmra.mxu0 %v1325
    %v1382 = vpop.f32.mrf.mxu0
    %v1383 = vadd.f32 0.0, %v1382
    %1384 = vdwg.mxu0
    %1385 = vmatpush.msra.mxu0 %v1277
    %1386 = vmatpush.msra.mxu0 %v1275
    %1387 = vmatpush.msra.mxu0 %v1273
    %1388 = vmatpush.msra.mxu0 %v1271
    %1389 = vmatpush.msra.mxu0 %v1269
    %1390 = vmatpush.msra.mxu0 %v1267
    %1391 = vmatpush.msra.mxu0 %v1265
    %1392 = vmatpush.msra.mxu0 %v1263
    %1393 = vmatpush.msra.mxu0 %v1261
    %1394 = vmatpush.msra.mxu0 %v1259
    %1395 = vmatpush.msra.mxu0 %v1257
    %1396 = vmatpush.msra.mxu0 %v1255
    %1397 = vmatpush.msra.mxu0 %v1253
    %1398 = vmatpush.msra.mxu0 %v1251
    %1399 = vmatpush.msra.mxu0 %v1249
    %1400 = vmatpush.msra.mxu0 %v1247
    %1401 = vmatmul.f32.gmra.mxu0 %v1207
    %v1402 = vpop.f32.mrf.mxu0
    %v1403 = vadd.f32 %v1345, %v1402
    %1404 = vmatmul.f32.gmra.mxu0 %v1210
    %v1405 = vpop.f32.mrf.mxu0
    %v1406 = vadd.f32 %v1348, %v1405
    %1407 = vmatmul.f32.gmra.mxu0 %v1213
    %v1408 = vpop.f32.mrf.mxu0
    %v1409 = vadd.f32 %v1351, %v1408
    %1410 = vmatmul.f32.gmra.mxu0 %v1216
    %v1411 = vpop.f32.mrf.mxu0
    %v1412 = vadd.f32 %v1354, %v1411
    %1413 = vdwg.mxu0
    %1414 = vmatpush.msra.mxu0 %v1309
    %1415 = vmatpush.msra.mxu0 %v1307
    %1416 = vmatpush.msra.mxu0 %v1305
    %1417 = vmatpush.msra.mxu0 %v1303
    %1418 = vmatpush.msra.mxu0 %v1301
    %1419 = vmatpush.msra.mxu0 %v1299
    %1420 = vmatpush.msra.mxu0 %v1297
    %1421 = vmatpush.msra.mxu0 %v1295
    %1422 = vmatpush.msra.mxu0 %v1293
    %1423 = vmatpush.msra.mxu0 %v1291
    %1424 = vmatpush.msra.mxu0 %v1289
    %1425 = vmatpush.msra.mxu0 %v1287
    %1426 = vmatpush.msra.mxu0 %v1285
    %1427 = vmatpush.msra.mxu0 %v1283
    %1428 = vmatpush.msra.mxu0 %v1281
    %1429 = vmatpush.msra.mxu0 %v1279
    %1430 = vmatmul.f32.gmra.mxu0 %v1236
    %v1431 = vpop.f32.mrf.mxu0
    %v1432 = vadd.f32 %v1403, %v1431
    %1433 = vmatmul.f32.gmra.mxu0 %v1239
    %v1434 = vpop.f32.mrf.mxu0
    %v1435 = vadd.f32 %v1406, %v1434
    %1436 = vmatmul.f32.gmra.mxu0 %v1242
    %v1437 = vpop.f32.mrf.mxu0
    %v1438 = vadd.f32 %v1409, %v1437
    %1439 = vmatmul.f32.gmra.mxu0 %v1245
    %v1440 = vpop.f32.mrf.mxu0
    %v1441 = vadd.f32 %v1412, %v1440
    %1442 = vdwg.mxu0
    %1443 = vmatpush.msra.mxu0 %v1278
    %1444 = vmatpush.msra.mxu0 %v1276
    %1445 = vmatpush.msra.mxu0 %v1274
    %1446 = vmatpush.msra.mxu0 %v1272
    %1447 = vmatpush.msra.mxu0 %v1270
    %1448 = vmatpush.msra.mxu0 %v1268
    %1449 = vmatpush.msra.mxu0 %v1266
    %1450 = vmatpush.msra.mxu0 %v1264
    %1451 = vmatpush.msra.mxu0 %v1262
    %1452 = vmatpush.msra.mxu0 %v1260
    %1453 = vmatpush.msra.mxu0 %v1258
    %1454 = vmatpush.msra.mxu0 %v1256
    %1455 = vmatpush.msra.mxu0 %v1254
    %1456 = vmatpush.msra.mxu0 %v1252
    %1457 = vmatpush.msra.mxu0 %v1250
    %1458 = vmatpush.msra.mxu0 %v1248
    %1459 = vmatmul.f32.gmra.mxu0 %v1207
    %v1460 = vpop.f32.mrf.mxu0
    %v1461 = vadd.f32 %v1374, %v1460
    %1462 = vmatmul.f32.gmra.mxu0 %v1210
    %v1463 = vpop.f32.mrf.mxu0
    %v1464 = vadd.f32 %v1377, %v1463
    %1465 = vmatmul.f32.gmra.mxu0 %v1213
    %v1466 = vpop.f32.mrf.mxu0
    %v1467 = vadd.f32 %v1380, %v1466
    %1468 = vmatmul.f32.gmra.mxu0 %v1216
    %v1469 = vpop.f32.mrf.mxu0
    %v1470 = vadd.f32 %v1383, %v1469
    %1471 = vdwg.mxu0
    %1472 = vmatpush.msra.mxu0 %v1310
    %1473 = vmatpush.msra.mxu0 %v1308
    %1474 = vmatpush.msra.mxu0 %v1306
    %1475 = vmatpush.msra.mxu0 %v1304
    %1476 = vmatpush.msra.mxu0 %v1302
    %1477 = vmatpush.msra.mxu0 %v1300
    %1478 = vmatpush.msra.mxu0 %v1298
    %1479 = vmatpush.msra.mxu0 %v1296
    %1480 = vmatpush.msra.mxu0 %v1294
    %1481 = vmatpush.msra.mxu0 %v1292
    %1482 = vmatpush.msra.mxu0 %v1290
    %1483 = vmatpush.msra.mxu0 %v1288
    %1484 = vmatpush.msra.mxu0 %v1286
    %1485 = vmatpush.msra.mxu0 %v1284
    %1486 = vmatpush.msra.mxu0 %v1282
    %1487 = vmatpush.msra.mxu0 %v1280
    %1488 = vmatmul.f32.gmra.mxu0 %v1236
    %v1489 = vpop.f32.mrf.mxu0
    %v1490 = vadd.f32 %v1461, %v1489
    %1491 = vmatmul.f32.gmra.mxu0 %v1239
    %v1492 = vpop.f32.mrf.mxu0
    %v1493 = vadd.f32 %v1464, %v1492
    %1494 = vmatmul.f32.gmra.mxu0 %v1242
    %v1495 = vpop.f32.mrf.mxu0
    %v1496 = vadd.f32 %v1467, %v1495
    %1497 = vmatmul.f32.gmra.mxu0 %v1245
    %v1498 = vpop.f32.mrf.mxu0
    %v1499 = vadd.f32 %v1470, %v1498
    %1500 = vdwg.mxu0
    %v1501 = vld [vmem:[%s16] sm:$0xff]
    %v1502 = vld [vmem:[%s16 + $0x8] sm:$0xff]
    %v1503 = vld [vmem:[%s16 + $0x10] sm:$0xff]
    %v1504 = vld [vmem:[%s16 + $0x18] sm:$0xff]
    %v1505 = vld [vmem:[%s16 + $0x20] sm:$0xff]
    %v1506 = vld [vmem:[%s16 + $0x28] sm:$0xff]
    %v1507 = vld [vmem:[%s16 + $0x30] sm:$0xff]
    %v1508 = vld [vmem:[%s16 + $0x38] sm:$0xff]
    %v1509 = vadd.f32 %v1432, %v1501
    %v1510 = vadd.f32 %v1490, %v1502
    %v1511 = vadd.f32 %v1435, %v1503
    %v1512 = vadd.f32 %v1493, %v1504
    %v1513 = vadd.f32 %v1438, %v1505
    %v1514 = vadd.f32 %v1496, %v1506
    %v1515 = vadd.f32 %v1441, %v1507
    %v1516 = vadd.f32 %v1499, %v1508
    %1517 = vst [vmem:[%s17] sm:$0xff] %v1509
    %1518 = vst [vmem:[%s17 + $0x8] sm:$0xff] %v1510
    %1519 = vst [vmem:[%s17 + $0x10] sm:$0xff] %v1511
    %1520 = vst [vmem:[%s17 + $0x18] sm:$0xff] %v1512
    %1521 = vst [vmem:[%s17 + $0x20] sm:$0xff] %v1513
    %1522 = vst [vmem:[%s17 + $0x28] sm:$0xff] %v1514
    %1523 = vst [vmem:[%s17 + $0x30] sm:$0xff] %v1515
    %1524 = vst [vmem:[%s17 + $0x38] sm:$0xff] %v1516
    // Predicated region
    $region126: #{forward.1} parent=1 // pred_check
      _
    $region127: #{forward.1} parent=1 // pred_check_branch
      %1526 = sbr.rel (0) target = $region129
    $region128: #{forward.1} parent=1 // pred_region
      _
    $region129: #{forward.1} parent=1 // pred_fallthru
      _
    // Predicated region
    $region130: #{forward.1} parent=1 // pred_check
      _
    $region131: #{forward.1} parent=1 // pred_check_branch
      %1528 = sbr.rel (0) target = $region133
    $region132: #{forward.1} parent=1 // pred_region
      _
    $region133: #{forward.1} parent=1 // pred_fallthru
      _
    %1529 = vsyncpa [#allocation3], 1
    %1530 = vsyncpa [#allocation5], 1
    %1531 = vsyncpa [#allocation8], 1
    %1532 = vsyncpa [#allocation11], 1
    %1533 = vsyncpa [#allocation14], 1
    %1534 = vsyncpa [#allocation17], 1
    %1535 = vsyncpa [#allocation20], 1
    %1536 = vsyncpa [#allocation23], 1

</llo_original>
